<compile_context>
chip_gen: v6e
topology: v6e:2x2x1
jax: 0.10.0
libtpu: 0.0.40
codegen_flags: <defaults>
</compile_context>

<pallas_src>
import functools

import jax
import jax.numpy as jnp
from jax.experimental import pallas as pl
from jax.experimental.pallas import tpu as pltpu

LN_EPS = 1e-5      # PyTorch nn.LayerNorm default
LANE = 128         # TPU vreg lane width
SUBLANE = 8        # f32 sublane width


def _round_up(x, m):
    return ((x + m - 1) // m) * m


_PARAM_ORDER = ("w1s", "w1a", "b1", "g1", "be1",
                "w2", "b2", "g2", "be2",
                "w3", "b3", "g3", "be3",
                "w4", "b4")


# ---------------------------------------------------------------------------
# Kernel: both Q towers for one batch tile (weights resident in VMEM).
# ---------------------------------------------------------------------------
def _critic_kernel(state_ref, action_ref,
                   w1s_ref, w1a_ref, b1_ref, g1_ref, be1_ref,
                   w2_ref, b2_ref, g2_ref, be2_ref,
                   w3_ref, b3_ref, g3_ref, be3_ref,
                   w4_ref, b4_ref,
                   out_ref, *, h_real):
    h_pad = w2_ref.shape[-1]
    inv_h = 1.0 / float(h_real)
    lane = jax.lax.broadcasted_iota(jnp.int32, (1, h_pad), 1)
    mask = (lane < h_real).astype(jnp.float32)   # 1 on real features, 0 on pad

    def relu_ln(y, g, be):
        # ReLU + LayerNorm over the REAL h_real features (padded lanes are 0
        # because weights/biases are zero-padded).
        y = jnp.maximum(y, 0.0)
        mu = jnp.sum(y, axis=-1, keepdims=True) * inv_h
        d = (y - mu) * mask
        var = jnp.sum(d * d, axis=-1, keepdims=True) * inv_h
        return d * jax.lax.rsqrt(var + LN_EPS) * g + be

    # bf16 operands for the MXU; accumulation + elementwise math in f32.
    s_b = state_ref[...].astype(jnp.bfloat16)
    a_b = action_ref[...].astype(jnp.bfloat16)

    for t in range(2):                     # two Q towers, unrolled
        y = (jnp.dot(s_b, w1s_ref[t], preferred_element_type=jnp.float32)
             + jnp.dot(a_b, w1a_ref[t], preferred_element_type=jnp.float32)
             + b1_ref[t])
        h = relu_ln(y, g1_ref[t], be1_ref[t])
        y = jnp.dot(h.astype(jnp.bfloat16), w2_ref[t],
                    preferred_element_type=jnp.float32) + b2_ref[t]
        h = relu_ln(y, g2_ref[t], be2_ref[t])
        y = jnp.dot(h.astype(jnp.bfloat16), w3_ref[t],
                    preferred_element_type=jnp.float32) + b3_ref[t]
        h = relu_ln(y, g3_ref[t], be3_ref[t])
        # out_features == 1 head: VPU multiply + lane reduction (skip an
        # N=1 MXU pass).
        q = jnp.sum(h * w4_ref[t], axis=-1, keepdims=True) + b4_ref[t]
        out_ref[:, t:t + 1] = q.astype(out_ref.dtype)


# ---------------------------------------------------------------------------
# Parameter packing: stack the two towers, pad hidden width to 128 lanes,
# cast MXU weights to bf16. Padded weight/bias/gamma/beta entries are zero.
# ---------------------------------------------------------------------------
def pack_critic_params(q1p, q2p, num_inputs):
    H = q1p["w2"].shape[0]
    Hp = _round_up(H, LANE)

    def stack(name):
        return jnp.stack([q1p[name], q2p[name]], axis=0)

    def pad_last(x, new):
        return jnp.pad(x, [(0, 0)] * (x.ndim - 1) + [(0, new - x.shape[-1])])

    w1 = stack("w1")                                       # (2, d_in, H)
    w1s = pad_last(w1[:, :num_inputs, :], Hp).astype(jnp.bfloat16)
    w1a = pad_last(w1[:, num_inputs:, :], Hp).astype(jnp.bfloat16)

    def pad_sq(w):                                         # (2, H, H) -> (2, Hp, Hp)
        w = pad_last(w, Hp)
        return jnp.pad(w, [(0, 0), (0, Hp - w.shape[1]), (0, 0)])

    w2 = pad_sq(stack("w2")).astype(jnp.bfloat16)
    w3 = pad_sq(stack("w3")).astype(jnp.bfloat16)
    w4 = pad_last(jnp.transpose(stack("w4"), (0, 2, 1)), Hp)   # (2, 1, Hp) f32
    b4 = stack("b4")                                           # (2, 1, 1)  f32

    def vec(name):
        return pad_last(stack(name), Hp)                       # (2, 1, Hp) f32

    packed = dict(w1s=w1s, w1a=w1a, b1=vec("b1"), g1=vec("g1"), be1=vec("be1"),
                  w2=w2, b2=vec("b2"), g2=vec("g2"), be2=vec("be2"),
                  w3=w3, b3=vec("b3"), g3=vec("g3"), be3=vec("be3"),
                  w4=w4, b4=b4)
    return packed, H


# ---------------------------------------------------------------------------
# Wrapper: batch grid, resident weights, parallel batch axis.
# ---------------------------------------------------------------------------
@functools.partial(jax.jit, static_argnames=("h_real",))
def critic_forward(state, action, packed, *, h_real):
    B, n_s = state.shape
    n_a = action.shape[1]

    tile_b = min(128, _round_up(max(B, 1), SUBLANE))
    B_pad = _round_up(B, tile_b)
    if B_pad != B:
        state = jnp.pad(state, ((0, B_pad - B), (0, 0)))
        action = jnp.pad(action, ((0, B_pad - B), (0, 0)))

    def resident(arr):
        nd = arr.ndim
        return pl.BlockSpec(arr.shape, lambda i, _nd=nd: (0,) * _nd)

    params = [packed[k] for k in _PARAM_ORDER]
    in_specs = ([pl.BlockSpec((tile_b, n_s), lambda i: (i, 0)),
                 pl.BlockSpec((tile_b, n_a), lambda i: (i, 0))]
                + [resident(p) for p in params])

    out = pl.pallas_call(
        functools.partial(_critic_kernel, h_real=h_real),
        grid=(B_pad // tile_b,),
        in_specs=in_specs,
        out_specs=pl.BlockSpec((tile_b, 2), lambda i: (i, 0)),
        out_shape=jax.ShapeDtypeStruct((B_pad, 2), jnp.float32),
        compiler_params=pltpu.CompilerParams(
            dimension_semantics=("parallel",)),
    )(state, action, *params)

    q = out[:B]
    return q[:, 0:1], q[:, 1:2]


# ---------------------------------------------------------------------------
# Deterministic init mimicking PyTorch defaults:
#   nn.Linear:   W, b ~ U(-1/sqrt(fan_in), 1/sqrt(fan_in))
#   linear4:     W, b ~ U(-init_w, init_w), init_w = 0.003
#   nn.LayerNorm: gamma = 1, beta = 0
# Weights stored as (in_features, out_features).
# ---------------------------------------------------------------------------
def init_softq_params(key, num_inputs, num_actions, hidden, init_w=0.003):
    h0, h1 = hidden
    assert h0 == h1, "reference module requires hidden_size[0] == hidden_size[1]"
    d_in = num_inputs + num_actions
    ks = jax.random.split(key, 8)

    def lin(kw, kb, fan_in, fan_out, bound):
        w = jax.random.uniform(kw, (fan_in, fan_out), jnp.float32, -bound, bound)
        b = jax.random.uniform(kb, (1, fan_out), jnp.float32, -bound, bound)
        return w, b

    w1, b1 = lin(ks[0], ks[1], d_in, h0, 1.0 / jnp.sqrt(d_in))
    w2, b2 = lin(ks[2], ks[3], h0, h0, 1.0 / jnp.sqrt(h0))
    w3, b3 = lin(ks[4], ks[5], h0, h1, 1.0 / jnp.sqrt(h0))
    w4, b4 = lin(ks[6], ks[7], h1, 1, init_w)

    ones = lambda n: jnp.ones((1, n), jnp.float32)
    zeros = lambda n: jnp.zeros((1, n), jnp.float32)
    return dict(w1=w1, b1=b1, g1=ones(h0), be1=zeros(h0),
                w2=w2, b2=b2, g2=ones(h1), be2=zeros(h1),
                w3=w3, b3=b3, g3=ones(h1), be3=zeros(h1),
                w4=w4, b4=b4)


def _reference_softq(x, p):
    """Pure-JAX f32 reference (matches the PyTorch module)."""
    def layer(h, w, b, g, be):
        y = jnp.maximum(h @ w + b, 0.0)
        mu = jnp.mean(y, axis=-1, keepdims=True)
        var = jnp.mean((y - mu) ** 2, axis=-1, keepdims=True)
        return ((y - mu) / jnp.sqrt(var + LN_EPS)) * g + be
    h = layer(x, p["w1"], p["b1"], p["g1"], p["be1"])
    h = layer(h, p["w2"], p["b2"], p["g2"], p["be2"])
    h = layer(h, p["w3"], p["b3"], p["g3"], p["be3"])
    return h @ p["w4"] + p["b4"]


if __name__ == "__main__":
    batch, num_inputs, num_actions = 2, 16, 4
    hidden = [32, 32]   # hidden_size[0] must equal hidden_size[1] (see header note)

    root = jax.random.PRNGKey(0)
    k_state, k_action, k_q1, k_q2 = jax.random.split(root, 4)

    state = jax.random.normal(k_state, (batch, num_inputs), jnp.float32)
    action = jax.random.normal(k_action, (batch, num_actions), jnp.float32)

    q1_params = init_softq_params(k_q1, num_inputs, num_actions, hidden)
    q2_params = init_softq_params(k_q2, num_inputs, num_actions, hidden)

    packed, h_real = pack_critic_params(q1_params, q2_params, num_inputs)

    q1, q2 = critic_forward(state, action, packed, h_real=h_real)
    jax.block_until_ready((q1, q2))

    # Verify against the pure-JAX f32 reference (bf16 MXU operands => relaxed tol).
    x = jnp.concatenate([state, action], axis=-1)
    ref1 = _reference_softq(x, q1_params)
    ref2 = _reference_softq(x, q2_params)
    assert q1.shape == (batch, 1) and q2.shape == (batch, 1)
    assert jnp.allclose(q1, ref1, atol=5e-3, rtol=5e-2), (q1, ref1)
    assert jnp.allclose(q2, ref2, atol=5e-3, rtol=5e-2), (q2, ref2)

    print("KERNEL_OK")
</pallas_src>

<mosaic_0001>
module attributes {stable_mosaic.version = 11 : i64} {
  func.func @_critic_kernel(%arg0: i32, %arg1: memref<8x16xf32, #tpu.memory_space<vmem>>, %arg2: memref<8x4xf32, #tpu.memory_space<vmem>>, %arg3: memref<2x16x128xbf16, #tpu.memory_space<vmem>>, %arg4: memref<2x4x128xbf16, #tpu.memory_space<vmem>>, %arg5: memref<2x1x128xf32, #tpu.memory_space<vmem>>, %arg6: memref<2x1x128xf32, #tpu.memory_space<vmem>>, %arg7: memref<2x1x128xf32, #tpu.memory_space<vmem>>, %arg8: memref<2x128x128xbf16, #tpu.memory_space<vmem>>, %arg9: memref<2x1x128xf32, #tpu.memory_space<vmem>>, %arg10: memref<2x1x128xf32, #tpu.memory_space<vmem>>, %arg11: memref<2x1x128xf32, #tpu.memory_space<vmem>>, %arg12: memref<2x128x128xbf16, #tpu.memory_space<vmem>>, %arg13: memref<2x1x128xf32, #tpu.memory_space<vmem>>, %arg14: memref<2x1x128xf32, #tpu.memory_space<vmem>>, %arg15: memref<2x1x128xf32, #tpu.memory_space<vmem>>, %arg16: memref<2x1x128xf32, #tpu.memory_space<vmem>>, %arg17: memref<2x1x1xf32, #tpu.memory_space<vmem>>, %arg18: memref<8x2xf32, #tpu.memory_space<vmem>>) attributes {dimension_semantics = [#tpu.dimension_semantics<parallel>], iteration_bounds = array<i64: 1>, scalar_prefetch = 0 : i64, scratch_operands = 0 : i64, tpu.core_type = #tpu.core_type<tc>, window_params = [{transform_indices = @transform_0, window_bounds = array<i64: 8, 16>}, {transform_indices = @transform_1, window_bounds = array<i64: 8, 4>}, {pipeline_mode = #tpu.pipeline_mode<synchronous>, transform_indices = @transform_2, window_bounds = array<i64: 2, 16, 128>}, {pipeline_mode = #tpu.pipeline_mode<synchronous>, transform_indices = @transform_3, window_bounds = array<i64: 2, 4, 128>}, {pipeline_mode = #tpu.pipeline_mode<synchronous>, transform_indices = @transform_4, window_bounds = array<i64: 2, 1, 128>}, {pipeline_mode = #tpu.pipeline_mode<synchronous>, transform_indices = @transform_5, window_bounds = array<i64: 2, 1, 128>}, {pipeline_mode = #tpu.pipeline_mode<synchronous>, transform_indices = @transform_6, window_bounds = array<i64: 2, 1, 128>}, {pipeline_mode = #tpu.pipeline_mode<synchronous>, transform_indices = @transform_7, window_bounds = array<i64: 2, 128, 128>}, {pipeline_mode = #tpu.pipeline_mode<synchronous>, transform_indices = @transform_8, window_bounds = array<i64: 2, 1, 128>}, {pipeline_mode = #tpu.pipeline_mode<synchronous>, transform_indices = @transform_9, window_bounds = array<i64: 2, 1, 128>}, {pipeline_mode = #tpu.pipeline_mode<synchronous>, transform_indices = @transform_10, window_bounds = array<i64: 2, 1, 128>}, {pipeline_mode = #tpu.pipeline_mode<synchronous>, transform_indices = @transform_11, window_bounds = array<i64: 2, 128, 128>}, {pipeline_mode = #tpu.pipeline_mode<synchronous>, transform_indices = @transform_12, window_bounds = array<i64: 2, 1, 128>}, {pipeline_mode = #tpu.pipeline_mode<synchronous>, transform_indices = @transform_13, window_bounds = array<i64: 2, 1, 128>}, {pipeline_mode = #tpu.pipeline_mode<synchronous>, transform_indices = @transform_14, window_bounds = array<i64: 2, 1, 128>}, {pipeline_mode = #tpu.pipeline_mode<synchronous>, transform_indices = @transform_15, window_bounds = array<i64: 2, 1, 128>}, {pipeline_mode = #tpu.pipeline_mode<synchronous>, transform_indices = @transform_16, window_bounds = array<i64: 2, 1, 1>}, {transform_indices = @transform_17, window_bounds = array<i64: 8, 2>}]} {
    %0 = tpu.iota {dimensions = array<i32: 1>} : vector<1x128xi32>
    %c32_i32 = arith.constant 32 : i32
    %1 = vector.broadcast %c32_i32 : i32 to vector<1x128xi32>
    %2 = arith.cmpi slt, %0, %1 : vector<1x128xi32>
    %3 = arith.extui %2 : vector<1x128xi1> to vector<1x128xi32>
    %4 = arith.sitofp %3 : vector<1x128xi32> to vector<1x128xf32>
    %c0 = arith.constant 0 : index
    %c0_0 = arith.constant 0 : index
    %5 = vector.load %arg1[%c0, %c0_0] : memref<8x16xf32, #tpu.memory_space<vmem>>, vector<8x16xf32>
    %6 = arith.truncf %5 : vector<8x16xf32> to vector<8x16xbf16>
    %c0_1 = arith.constant 0 : index
    %c0_2 = arith.constant 0 : index
    %7 = vector.load %arg2[%c0_1, %c0_2] : memref<8x4xf32, #tpu.memory_space<vmem>>, vector<8x4xf32>
    %8 = arith.truncf %7 : vector<8x4xf32> to vector<8x4xbf16>
    %c0_3 = arith.constant 0 : index
    %c0_4 = arith.constant 0 : index
    %c0_5 = arith.constant 0 : index
    %9 = vector.load %arg3[%c0_3, %c0_4, %c0_5] : memref<2x16x128xbf16, #tpu.memory_space<vmem>>, vector<1x16x128xbf16>
    %10 = vector.shape_cast %9 : vector<1x16x128xbf16> to vector<16x128xbf16>
    %cst = arith.constant dense<0.000000e+00> : vector<8x128xf32>
    %11 = tpu.matmul %6, %10, %cst {dimension_numbers = #tpu.dot_dimension_numbers<[1], [0], [0], [1], [0, 0, 1, 1], [], []>} : vector<8x16xbf16>, vector<16x128xbf16>, vector<8x128xf32> -> vector<8x128xf32>
    %c0_6 = arith.constant 0 : index
    %c0_7 = arith.constant 0 : index
    %c0_8 = arith.constant 0 : index
    %12 = vector.load %arg4[%c0_6, %c0_7, %c0_8] : memref<2x4x128xbf16, #tpu.memory_space<vmem>>, vector<1x4x128xbf16>
    %13 = vector.shape_cast %12 : vector<1x4x128xbf16> to vector<4x128xbf16>
    %cst_9 = arith.constant dense<0.000000e+00> : vector<8x128xf32>
    %14 = tpu.matmul %8, %13, %cst_9 {dimension_numbers = #tpu.dot_dimension_numbers<[1], [0], [0], [1], [0, 0, 1, 1], [], []>} : vector<8x4xbf16>, vector<4x128xbf16>, vector<8x128xf32> -> vector<8x128xf32>
    %15 = arith.addf %11, %14 : vector<8x128xf32>
    %c0_10 = arith.constant 0 : index
    %c0_11 = arith.constant 0 : index
    %c0_12 = arith.constant 0 : index
    %16 = vector.load %arg5[%c0_10, %c0_11, %c0_12] : memref<2x1x128xf32, #tpu.memory_space<vmem>>, vector<1x1x128xf32>
    %17 = vector.shape_cast %16 : vector<1x1x128xf32> to vector<1x128xf32>
    %18 = vector.broadcast %17 : vector<1x128xf32> to vector<8x128xf32>
    %19 = arith.addf %15, %18 : vector<8x128xf32>
    %c0_13 = arith.constant 0 : index
    %c0_14 = arith.constant 0 : index
    %c0_15 = arith.constant 0 : index
    %20 = vector.load %arg6[%c0_13, %c0_14, %c0_15] : memref<2x1x128xf32, #tpu.memory_space<vmem>>, vector<1x1x128xf32>
    %21 = vector.shape_cast %20 : vector<1x1x128xf32> to vector<1x128xf32>
    %c0_16 = arith.constant 0 : index
    %c0_17 = arith.constant 0 : index
    %c0_18 = arith.constant 0 : index
    %22 = vector.load %arg7[%c0_16, %c0_17, %c0_18] : memref<2x1x128xf32, #tpu.memory_space<vmem>>, vector<1x1x128xf32>
    %23 = vector.shape_cast %22 : vector<1x1x128xf32> to vector<1x128xf32>
    %cst_19 = arith.constant 0.000000e+00 : f32
    %24 = vector.broadcast %cst_19 : f32 to vector<8x128xf32>
    %25 = arith.maximumf %19, %24 : vector<8x128xf32>
    %cst_20 = arith.constant dense<0.000000e+00> : vector<8xf32>
    %26 = vector.multi_reduction <add>, %25, %cst_20 [1] : vector<8x128xf32> to vector<8xf32>
    %27 = vector.shape_cast %26 : vector<8xf32> to vector<8x1xf32>
    %cst_21 = arith.constant 3.125000e-02 : f32
    %28 = vector.broadcast %cst_21 : f32 to vector<8x1xf32>
    %29 = arith.mulf %27, %28 : vector<8x1xf32>
    %30 = vector.broadcast %29 : vector<8x1xf32> to vector<8x128xf32>
    %31 = arith.subf %25, %30 : vector<8x128xf32>
    %32 = vector.broadcast %4 : vector<1x128xf32> to vector<8x128xf32>
    %33 = arith.mulf %31, %32 : vector<8x128xf32>
    %34 = arith.mulf %33, %33 : vector<8x128xf32>
    %cst_22 = arith.constant dense<0.000000e+00> : vector<8xf32>
    %35 = vector.multi_reduction <add>, %34, %cst_22 [1] : vector<8x128xf32> to vector<8xf32>
    %36 = vector.shape_cast %35 : vector<8xf32> to vector<8x1xf32>
    %cst_23 = arith.constant 3.125000e-02 : f32
    %37 = vector.broadcast %cst_23 : f32 to vector<8x1xf32>
    %38 = arith.mulf %36, %37 : vector<8x1xf32>
    %cst_24 = arith.constant 9.99999974E-6 : f32
    %39 = vector.broadcast %cst_24 : f32 to vector<8x1xf32>
    %40 = arith.addf %38, %39 : vector<8x1xf32>
    %41 = math.rsqrt %40 : vector<8x1xf32>
    %42 = vector.broadcast %41 : vector<8x1xf32> to vector<8x128xf32>
    %43 = arith.mulf %33, %42 : vector<8x128xf32>
    %44 = vector.broadcast %21 : vector<1x128xf32> to vector<8x128xf32>
    %45 = arith.mulf %43, %44 : vector<8x128xf32>
    %46 = vector.broadcast %23 : vector<1x128xf32> to vector<8x128xf32>
    %47 = arith.addf %45, %46 : vector<8x128xf32>
    %48 = arith.truncf %47 : vector<8x128xf32> to vector<8x128xbf16>
    %c0_25 = arith.constant 0 : index
    %c0_26 = arith.constant 0 : index
    %c0_27 = arith.constant 0 : index
    %49 = vector.load %arg8[%c0_25, %c0_26, %c0_27] : memref<2x128x128xbf16, #tpu.memory_space<vmem>>, vector<1x128x128xbf16>
    %50 = vector.shape_cast %49 : vector<1x128x128xbf16> to vector<128x128xbf16>
    %cst_28 = arith.constant dense<0.000000e+00> : vector<8x128xf32>
    %51 = tpu.matmul %48, %50, %cst_28 {dimension_numbers = #tpu.dot_dimension_numbers<[1], [0], [0], [1], [0, 0, 1, 1], [], []>} : vector<8x128xbf16>, vector<128x128xbf16>, vector<8x128xf32> -> vector<8x128xf32>
    %c0_29 = arith.constant 0 : index
    %c0_30 = arith.constant 0 : index
    %c0_31 = arith.constant 0 : index
    %52 = vector.load %arg9[%c0_29, %c0_30, %c0_31] : memref<2x1x128xf32, #tpu.memory_space<vmem>>, vector<1x1x128xf32>
    %53 = vector.shape_cast %52 : vector<1x1x128xf32> to vector<1x128xf32>
    %54 = vector.broadcast %53 : vector<1x128xf32> to vector<8x128xf32>
    %55 = arith.addf %51, %54 : vector<8x128xf32>
    %c0_32 = arith.constant 0 : index
    %c0_33 = arith.constant 0 : index
    %c0_34 = arith.constant 0 : index
    %56 = vector.load %arg10[%c0_32, %c0_33, %c0_34] : memref<2x1x128xf32, #tpu.memory_space<vmem>>, vector<1x1x128xf32>
    %57 = vector.shape_cast %56 : vector<1x1x128xf32> to vector<1x128xf32>
    %c0_35 = arith.constant 0 : index
    %c0_36 = arith.constant 0 : index
    %c0_37 = arith.constant 0 : index
    %58 = vector.load %arg11[%c0_35, %c0_36, %c0_37] : memref<2x1x128xf32, #tpu.memory_space<vmem>>, vector<1x1x128xf32>
    %59 = vector.shape_cast %58 : vector<1x1x128xf32> to vector<1x128xf32>
    %cst_38 = arith.constant 0.000000e+00 : f32
    %60 = vector.broadcast %cst_38 : f32 to vector<8x128xf32>
    %61 = arith.maximumf %55, %60 : vector<8x128xf32>
    %cst_39 = arith.constant dense<0.000000e+00> : vector<8xf32>
    %62 = vector.multi_reduction <add>, %61, %cst_39 [1] : vector<8x128xf32> to vector<8xf32>
    %63 = vector.shape_cast %62 : vector<8xf32> to vector<8x1xf32>
    %cst_40 = arith.constant 3.125000e-02 : f32
    %64 = vector.broadcast %cst_40 : f32 to vector<8x1xf32>
    %65 = arith.mulf %63, %64 : vector<8x1xf32>
    %66 = vector.broadcast %65 : vector<8x1xf32> to vector<8x128xf32>
    %67 = arith.subf %61, %66 : vector<8x128xf32>
    %68 = vector.broadcast %4 : vector<1x128xf32> to vector<8x128xf32>
    %69 = arith.mulf %67, %68 : vector<8x128xf32>
    %70 = arith.mulf %69, %69 : vector<8x128xf32>
    %cst_41 = arith.constant dense<0.000000e+00> : vector<8xf32>
    %71 = vector.multi_reduction <add>, %70, %cst_41 [1] : vector<8x128xf32> to vector<8xf32>
    %72 = vector.shape_cast %71 : vector<8xf32> to vector<8x1xf32>
    %cst_42 = arith.constant 3.125000e-02 : f32
    %73 = vector.broadcast %cst_42 : f32 to vector<8x1xf32>
    %74 = arith.mulf %72, %73 : vector<8x1xf32>
    %cst_43 = arith.constant 9.99999974E-6 : f32
    %75 = vector.broadcast %cst_43 : f32 to vector<8x1xf32>
    %76 = arith.addf %74, %75 : vector<8x1xf32>
    %77 = math.rsqrt %76 : vector<8x1xf32>
    %78 = vector.broadcast %77 : vector<8x1xf32> to vector<8x128xf32>
    %79 = arith.mulf %69, %78 : vector<8x128xf32>
    %80 = vector.broadcast %57 : vector<1x128xf32> to vector<8x128xf32>
    %81 = arith.mulf %79, %80 : vector<8x128xf32>
    %82 = vector.broadcast %59 : vector<1x128xf32> to vector<8x128xf32>
    %83 = arith.addf %81, %82 : vector<8x128xf32>
    %84 = arith.truncf %83 : vector<8x128xf32> to vector<8x128xbf16>
    %c0_44 = arith.constant 0 : index
    %c0_45 = arith.constant 0 : index
    %c0_46 = arith.constant 0 : index
    %85 = vector.load %arg12[%c0_44, %c0_45, %c0_46] : memref<2x128x128xbf16, #tpu.memory_space<vmem>>, vector<1x128x128xbf16>
    %86 = vector.shape_cast %85 : vector<1x128x128xbf16> to vector<128x128xbf16>
    %cst_47 = arith.constant dense<0.000000e+00> : vector<8x128xf32>
    %87 = tpu.matmul %84, %86, %cst_47 {dimension_numbers = #tpu.dot_dimension_numbers<[1], [0], [0], [1], [0, 0, 1, 1], [], []>} : vector<8x128xbf16>, vector<128x128xbf16>, vector<8x128xf32> -> vector<8x128xf32>
    %c0_48 = arith.constant 0 : index
    %c0_49 = arith.constant 0 : index
    %c0_50 = arith.constant 0 : index
    %88 = vector.load %arg13[%c0_48, %c0_49, %c0_50] : memref<2x1x128xf32, #tpu.memory_space<vmem>>, vector<1x1x128xf32>
    %89 = vector.shape_cast %88 : vector<1x1x128xf32> to vector<1x128xf32>
    %90 = vector.broadcast %89 : vector<1x128xf32> to vector<8x128xf32>
    %91 = arith.addf %87, %90 : vector<8x128xf32>
    %c0_51 = arith.constant 0 : index
    %c0_52 = arith.constant 0 : index
    %c0_53 = arith.constant 0 : index
    %92 = vector.load %arg14[%c0_51, %c0_52, %c0_53] : memref<2x1x128xf32, #tpu.memory_space<vmem>>, vector<1x1x128xf32>
    %93 = vector.shape_cast %92 : vector<1x1x128xf32> to vector<1x128xf32>
    %c0_54 = arith.constant 0 : index
    %c0_55 = arith.constant 0 : index
    %c0_56 = arith.constant 0 : index
    %94 = vector.load %arg15[%c0_54, %c0_55, %c0_56] : memref<2x1x128xf32, #tpu.memory_space<vmem>>, vector<1x1x128xf32>
    %95 = vector.shape_cast %94 : vector<1x1x128xf32> to vector<1x128xf32>
    %cst_57 = arith.constant 0.000000e+00 : f32
    %96 = vector.broadcast %cst_57 : f32 to vector<8x128xf32>
    %97 = arith.maximumf %91, %96 : vector<8x128xf32>
    %cst_58 = arith.constant dense<0.000000e+00> : vector<8xf32>
    %98 = vector.multi_reduction <add>, %97, %cst_58 [1] : vector<8x128xf32> to vector<8xf32>
    %99 = vector.shape_cast %98 : vector<8xf32> to vector<8x1xf32>
    %cst_59 = arith.constant 3.125000e-02 : f32
    %100 = vector.broadcast %cst_59 : f32 to vector<8x1xf32>
    %101 = arith.mulf %99, %100 : vector<8x1xf32>
    %102 = vector.broadcast %101 : vector<8x1xf32> to vector<8x128xf32>
    %103 = arith.subf %97, %102 : vector<8x128xf32>
    %104 = vector.broadcast %4 : vector<1x128xf32> to vector<8x128xf32>
    %105 = arith.mulf %103, %104 : vector<8x128xf32>
    %106 = arith.mulf %105, %105 : vector<8x128xf32>
    %cst_60 = arith.constant dense<0.000000e+00> : vector<8xf32>
    %107 = vector.multi_reduction <add>, %106, %cst_60 [1] : vector<8x128xf32> to vector<8xf32>
    %108 = vector.shape_cast %107 : vector<8xf32> to vector<8x1xf32>
    %cst_61 = arith.constant 3.125000e-02 : f32
    %109 = vector.broadcast %cst_61 : f32 to vector<8x1xf32>
    %110 = arith.mulf %108, %109 : vector<8x1xf32>
    %cst_62 = arith.constant 9.99999974E-6 : f32
    %111 = vector.broadcast %cst_62 : f32 to vector<8x1xf32>
    %112 = arith.addf %110, %111 : vector<8x1xf32>
    %113 = math.rsqrt %112 : vector<8x1xf32>
    %114 = vector.broadcast %113 : vector<8x1xf32> to vector<8x128xf32>
    %115 = arith.mulf %105, %114 : vector<8x128xf32>
    %116 = vector.broadcast %93 : vector<1x128xf32> to vector<8x128xf32>
    %117 = arith.mulf %115, %116 : vector<8x128xf32>
    %118 = vector.broadcast %95 : vector<1x128xf32> to vector<8x128xf32>
    %119 = arith.addf %117, %118 : vector<8x128xf32>
    %c0_63 = arith.constant 0 : index
    %c0_64 = arith.constant 0 : index
    %c0_65 = arith.constant 0 : index
    %120 = vector.load %arg16[%c0_63, %c0_64, %c0_65] : memref<2x1x128xf32, #tpu.memory_space<vmem>>, vector<1x1x128xf32>
    %121 = vector.shape_cast %120 : vector<1x1x128xf32> to vector<1x128xf32>
    %122 = vector.broadcast %121 : vector<1x128xf32> to vector<8x128xf32>
    %123 = arith.mulf %119, %122 : vector<8x128xf32>
    %cst_66 = arith.constant dense<0.000000e+00> : vector<8xf32>
    %124 = vector.multi_reduction <add>, %123, %cst_66 [1] : vector<8x128xf32> to vector<8xf32>
    %125 = vector.shape_cast %124 : vector<8xf32> to vector<8x1xf32>
    %c0_67 = arith.constant 0 : index
    %c0_68 = arith.constant 0 : index
    %c0_69 = arith.constant 0 : index
    %126 = vector.load %arg17[%c0_67, %c0_68, %c0_69] : memref<2x1x1xf32, #tpu.memory_space<vmem>>, vector<1x1x1xf32>
    %127 = vector.shape_cast %126 : vector<1x1x1xf32> to vector<1x1xf32>
    %128 = vector.broadcast %127 : vector<1x1xf32> to vector<8x1xf32>
    %129 = arith.addf %125, %128 : vector<8x1xf32>
    %c0_70 = arith.constant 0 : index
    %c0_71 = arith.constant 0 : index
    %130 = vector.load %arg18[%c0_70, %c0_71] : memref<8x2xf32, #tpu.memory_space<vmem>>, vector<8x1xf32>
    tpu.vector_store %arg18[%c0_70, %c0_71], %129 {strides = array<i32>} : memref<8x2xf32, #tpu.memory_space<vmem>>, vector<8x1xf32>,
    %c1 = arith.constant 1 : index
    %c0_72 = arith.constant 0 : index
    %c0_73 = arith.constant 0 : index
    %131 = vector.load %arg3[%c1, %c0_72, %c0_73] : memref<2x16x128xbf16, #tpu.memory_space<vmem>>, vector<1x16x128xbf16>
    %132 = vector.shape_cast %131 : vector<1x16x128xbf16> to vector<16x128xbf16>
    %cst_74 = arith.constant dense<0.000000e+00> : vector<8x128xf32>
    %133 = tpu.matmul %6, %132, %cst_74 {dimension_numbers = #tpu.dot_dimension_numbers<[1], [0], [0], [1], [0, 0, 1, 1], [], []>} : vector<8x16xbf16>, vector<16x128xbf16>, vector<8x128xf32> -> vector<8x128xf32>
    %c1_75 = arith.constant 1 : index
    %c0_76 = arith.constant 0 : index
    %c0_77 = arith.constant 0 : index
    %134 = vector.load %arg4[%c1_75, %c0_76, %c0_77] : memref<2x4x128xbf16, #tpu.memory_space<vmem>>, vector<1x4x128xbf16>
    %135 = vector.shape_cast %134 : vector<1x4x128xbf16> to vector<4x128xbf16>
    %cst_78 = arith.constant dense<0.000000e+00> : vector<8x128xf32>
    %136 = tpu.matmul %8, %135, %cst_78 {dimension_numbers = #tpu.dot_dimension_numbers<[1], [0], [0], [1], [0, 0, 1, 1], [], []>} : vector<8x4xbf16>, vector<4x128xbf16>, vector<8x128xf32> -> vector<8x128xf32>
    %137 = arith.addf %133, %136 : vector<8x128xf32>
    %c1_79 = arith.constant 1 : index
    %c0_80 = arith.constant 0 : index
    %c0_81 = arith.constant 0 : index
    %138 = vector.load %arg5[%c1_79, %c0_80, %c0_81] : memref<2x1x128xf32, #tpu.memory_space<vmem>>, vector<1x1x128xf32>
    %139 = vector.shape_cast %138 : vector<1x1x128xf32> to vector<1x128xf32>
    %140 = vector.broadcast %139 : vector<1x128xf32> to vector<8x128xf32>
    %141 = arith.addf %137, %140 : vector<8x128xf32>
    %c1_82 = arith.constant 1 : index
    %c0_83 = arith.constant 0 : index
    %c0_84 = arith.constant 0 : index
    %142 = vector.load %arg6[%c1_82, %c0_83, %c0_84] : memref<2x1x128xf32, #tpu.memory_space<vmem>>, vector<1x1x128xf32>
    %143 = vector.shape_cast %142 : vector<1x1x128xf32> to vector<1x128xf32>
    %c1_85 = arith.constant 1 : index
    %c0_86 = arith.constant 0 : index
    %c0_87 = arith.constant 0 : index
    %144 = vector.load %arg7[%c1_85, %c0_86, %c0_87] : memref<2x1x128xf32, #tpu.memory_space<vmem>>, vector<1x1x128xf32>
    %145 = vector.shape_cast %144 : vector<1x1x128xf32> to vector<1x128xf32>
    %cst_88 = arith.constant 0.000000e+00 : f32
    %146 = vector.broadcast %cst_88 : f32 to vector<8x128xf32>
    %147 = arith.maximumf %141, %146 : vector<8x128xf32>
    %cst_89 = arith.constant dense<0.000000e+00> : vector<8xf32>
    %148 = vector.multi_reduction <add>, %147, %cst_89 [1] : vector<8x128xf32> to vector<8xf32>
    %149 = vector.shape_cast %148 : vector<8xf32> to vector<8x1xf32>
    %cst_90 = arith.constant 3.125000e-02 : f32
    %150 = vector.broadcast %cst_90 : f32 to vector<8x1xf32>
    %151 = arith.mulf %149, %150 : vector<8x1xf32>
    %152 = vector.broadcast %151 : vector<8x1xf32> to vector<8x128xf32>
    %153 = arith.subf %147, %152 : vector<8x128xf32>
    %154 = vector.broadcast %4 : vector<1x128xf32> to vector<8x128xf32>
    %155 = arith.mulf %153, %154 : vector<8x128xf32>
    %156 = arith.mulf %155, %155 : vector<8x128xf32>
    %cst_91 = arith.constant dense<0.000000e+00> : vector<8xf32>
    %157 = vector.multi_reduction <add>, %156, %cst_91 [1] : vector<8x128xf32> to vector<8xf32>
    %158 = vector.shape_cast %157 : vector<8xf32> to vector<8x1xf32>
    %cst_92 = arith.constant 3.125000e-02 : f32
    %159 = vector.broadcast %cst_92 : f32 to vector<8x1xf32>
    %160 = arith.mulf %158, %159 : vector<8x1xf32>
    %cst_93 = arith.constant 9.99999974E-6 : f32
    %161 = vector.broadcast %cst_93 : f32 to vector<8x1xf32>
    %162 = arith.addf %160, %161 : vector<8x1xf32>
    %163 = math.rsqrt %162 : vector<8x1xf32>
    %164 = vector.broadcast %163 : vector<8x1xf32> to vector<8x128xf32>
    %165 = arith.mulf %155, %164 : vector<8x128xf32>
    %166 = vector.broadcast %143 : vector<1x128xf32> to vector<8x128xf32>
    %167 = arith.mulf %165, %166 : vector<8x128xf32>
    %168 = vector.broadcast %145 : vector<1x128xf32> to vector<8x128xf32>
    %169 = arith.addf %167, %168 : vector<8x128xf32>
    %170 = arith.truncf %169 : vector<8x128xf32> to vector<8x128xbf16>
    %c1_94 = arith.constant 1 : index
    %c0_95 = arith.constant 0 : index
    %c0_96 = arith.constant 0 : index
    %171 = vector.load %arg8[%c1_94, %c0_95, %c0_96] : memref<2x128x128xbf16, #tpu.memory_space<vmem>>, vector<1x128x128xbf16>
    %172 = vector.shape_cast %171 : vector<1x128x128xbf16> to vector<128x128xbf16>
    %cst_97 = arith.constant dense<0.000000e+00> : vector<8x128xf32>
    %173 = tpu.matmul %170, %172, %cst_97 {dimension_numbers = #tpu.dot_dimension_numbers<[1], [0], [0], [1], [0, 0, 1, 1], [], []>} : vector<8x128xbf16>, vector<128x128xbf16>, vector<8x128xf32> -> vector<8x128xf32>
    %c1_98 = arith.constant 1 : index
    %c0_99 = arith.constant 0 : index
    %c0_100 = arith.constant 0 : index
    %174 = vector.load %arg9[%c1_98, %c0_99, %c0_100] : memref<2x1x128xf32, #tpu.memory_space<vmem>>, vector<1x1x128xf32>
    %175 = vector.shape_cast %174 : vector<1x1x128xf32> to vector<1x128xf32>
    %176 = vector.broadcast %175 : vector<1x128xf32> to vector<8x128xf32>
    %177 = arith.addf %173, %176 : vector<8x128xf32>
    %c1_101 = arith.constant 1 : index
    %c0_102 = arith.constant 0 : index
    %c0_103 = arith.constant 0 : index
    %178 = vector.load %arg10[%c1_101, %c0_102, %c0_103] : memref<2x1x128xf32, #tpu.memory_space<vmem>>, vector<1x1x128xf32>
    %179 = vector.shape_cast %178 : vector<1x1x128xf32> to vector<1x128xf32>
    %c1_104 = arith.constant 1 : index
    %c0_105 = arith.constant 0 : index
    %c0_106 = arith.constant 0 : index
    %180 = vector.load %arg11[%c1_104, %c0_105, %c0_106] : memref<2x1x128xf32, #tpu.memory_space<vmem>>, vector<1x1x128xf32>
    %181 = vector.shape_cast %180 : vector<1x1x128xf32> to vector<1x128xf32>
    %cst_107 = arith.constant 0.000000e+00 : f32
    %182 = vector.broadcast %cst_107 : f32 to vector<8x128xf32>
    %183 = arith.maximumf %177, %182 : vector<8x128xf32>
    %cst_108 = arith.constant dense<0.000000e+00> : vector<8xf32>
    %184 = vector.multi_reduction <add>, %183, %cst_108 [1] : vector<8x128xf32> to vector<8xf32>
    %185 = vector.shape_cast %184 : vector<8xf32> to vector<8x1xf32>
    %cst_109 = arith.constant 3.125000e-02 : f32
    %186 = vector.broadcast %cst_109 : f32 to vector<8x1xf32>
    %187 = arith.mulf %185, %186 : vector<8x1xf32>
    %188 = vector.broadcast %187 : vector<8x1xf32> to vector<8x128xf32>
    %189 = arith.subf %183, %188 : vector<8x128xf32>
    %190 = vector.broadcast %4 : vector<1x128xf32> to vector<8x128xf32>
    %191 = arith.mulf %189, %190 : vector<8x128xf32>
    %192 = arith.mulf %191, %191 : vector<8x128xf32>
    %cst_110 = arith.constant dense<0.000000e+00> : vector<8xf32>
    %193 = vector.multi_reduction <add>, %192, %cst_110 [1] : vector<8x128xf32> to vector<8xf32>
    %194 = vector.shape_cast %193 : vector<8xf32> to vector<8x1xf32>
    %cst_111 = arith.constant 3.125000e-02 : f32
    %195 = vector.broadcast %cst_111 : f32 to vector<8x1xf32>
    %196 = arith.mulf %194, %195 : vector<8x1xf32>
    %cst_112 = arith.constant 9.99999974E-6 : f32
    %197 = vector.broadcast %cst_112 : f32 to vector<8x1xf32>
    %198 = arith.addf %196, %197 : vector<8x1xf32>
    %199 = math.rsqrt %198 : vector<8x1xf32>
    %200 = vector.broadcast %199 : vector<8x1xf32> to vector<8x128xf32>
    %201 = arith.mulf %191, %200 : vector<8x128xf32>
    %202 = vector.broadcast %179 : vector<1x128xf32> to vector<8x128xf32>
    %203 = arith.mulf %201, %202 : vector<8x128xf32>
    %204 = vector.broadcast %181 : vector<1x128xf32> to vector<8x128xf32>
    %205 = arith.addf %203, %204 : vector<8x128xf32>
    %206 = arith.truncf %205 : vector<8x128xf32> to vector<8x128xbf16>
    %c1_113 = arith.constant 1 : index
    %c0_114 = arith.constant 0 : index
    %c0_115 = arith.constant 0 : index
    %207 = vector.load %arg12[%c1_113, %c0_114, %c0_115] : memref<2x128x128xbf16, #tpu.memory_space<vmem>>, vector<1x128x128xbf16>
    %208 = vector.shape_cast %207 : vector<1x128x128xbf16> to vector<128x128xbf16>
    %cst_116 = arith.constant dense<0.000000e+00> : vector<8x128xf32>
    %209 = tpu.matmul %206, %208, %cst_116 {dimension_numbers = #tpu.dot_dimension_numbers<[1], [0], [0], [1], [0, 0, 1, 1], [], []>} : vector<8x128xbf16>, vector<128x128xbf16>, vector<8x128xf32> -> vector<8x128xf32>
    %c1_117 = arith.constant 1 : index
    %c0_118 = arith.constant 0 : index
    %c0_119 = arith.constant 0 : index
    %210 = vector.load %arg13[%c1_117, %c0_118, %c0_119] : memref<2x1x128xf32, #tpu.memory_space<vmem>>, vector<1x1x128xf32>
    %211 = vector.shape_cast %210 : vector<1x1x128xf32> to vector<1x128xf32>
    %212 = vector.broadcast %211 : vector<1x128xf32> to vector<8x128xf32>
    %213 = arith.addf %209, %212 : vector<8x128xf32>
    %c1_120 = arith.constant 1 : index
    %c0_121 = arith.constant 0 : index
    %c0_122 = arith.constant 0 : index
    %214 = vector.load %arg14[%c1_120, %c0_121, %c0_122] : memref<2x1x128xf32, #tpu.memory_space<vmem>>, vector<1x1x128xf32>
    %215 = vector.shape_cast %214 : vector<1x1x128xf32> to vector<1x128xf32>
    %c1_123 = arith.constant 1 : index
    %c0_124 = arith.constant 0 : index
    %c0_125 = arith.constant 0 : index
    %216 = vector.load %arg15[%c1_123, %c0_124, %c0_125] : memref<2x1x128xf32, #tpu.memory_space<vmem>>, vector<1x1x128xf32>
    %217 = vector.shape_cast %216 : vector<1x1x128xf32> to vector<1x128xf32>
    %cst_126 = arith.constant 0.000000e+00 : f32
    %218 = vector.broadcast %cst_126 : f32 to vector<8x128xf32>
    %219 = arith.maximumf %213, %218 : vector<8x128xf32>
    %cst_127 = arith.constant dense<0.000000e+00> : vector<8xf32>
    %220 = vector.multi_reduction <add>, %219, %cst_127 [1] : vector<8x128xf32> to vector<8xf32>
    %221 = vector.shape_cast %220 : vector<8xf32> to vector<8x1xf32>
    %cst_128 = arith.constant 3.125000e-02 : f32
    %222 = vector.broadcast %cst_128 : f32 to vector<8x1xf32>
    %223 = arith.mulf %221, %222 : vector<8x1xf32>
    %224 = vector.broadcast %223 : vector<8x1xf32> to vector<8x128xf32>
    %225 = arith.subf %219, %224 : vector<8x128xf32>
    %226 = vector.broadcast %4 : vector<1x128xf32> to vector<8x128xf32>
    %227 = arith.mulf %225, %226 : vector<8x128xf32>
    %228 = arith.mulf %227, %227 : vector<8x128xf32>
    %cst_129 = arith.constant dense<0.000000e+00> : vector<8xf32>
    %229 = vector.multi_reduction <add>, %228, %cst_129 [1] : vector<8x128xf32> to vector<8xf32>
    %230 = vector.shape_cast %229 : vector<8xf32> to vector<8x1xf32>
    %cst_130 = arith.constant 3.125000e-02 : f32
    %231 = vector.broadcast %cst_130 : f32 to vector<8x1xf32>
    %232 = arith.mulf %230, %231 : vector<8x1xf32>
    %cst_131 = arith.constant 9.99999974E-6 : f32
    %233 = vector.broadcast %cst_131 : f32 to vector<8x1xf32>
    %234 = arith.addf %232, %233 : vector<8x1xf32>
    %235 = math.rsqrt %234 : vector<8x1xf32>
    %236 = vector.broadcast %235 : vector<8x1xf32> to vector<8x128xf32>
    %237 = arith.mulf %227, %236 : vector<8x128xf32>
    %238 = vector.broadcast %215 : vector<1x128xf32> to vector<8x128xf32>
    %239 = arith.mulf %237, %238 : vector<8x128xf32>
    %240 = vector.broadcast %217 : vector<1x128xf32> to vector<8x128xf32>
    %241 = arith.addf %239, %240 : vector<8x128xf32>
    %c1_132 = arith.constant 1 : index
    %c0_133 = arith.constant 0 : index
    %c0_134 = arith.constant 0 : index
    %242 = vector.load %arg16[%c1_132, %c0_133, %c0_134] : memref<2x1x128xf32, #tpu.memory_space<vmem>>, vector<1x1x128xf32>
    %243 = vector.shape_cast %242 : vector<1x1x128xf32> to vector<1x128xf32>
    %244 = vector.broadcast %243 : vector<1x128xf32> to vector<8x128xf32>
    %245 = arith.mulf %241, %244 : vector<8x128xf32>
    %cst_135 = arith.constant dense<0.000000e+00> : vector<8xf32>
    %246 = vector.multi_reduction <add>, %245, %cst_135 [1] : vector<8x128xf32> to vector<8xf32>
    %247 = vector.shape_cast %246 : vector<8xf32> to vector<8x1xf32>
    %c1_136 = arith.constant 1 : index
    %c0_137 = arith.constant 0 : index
    %c0_138 = arith.constant 0 : index
    %248 = vector.load %arg17[%c1_136, %c0_137, %c0_138] : memref<2x1x1xf32, #tpu.memory_space<vmem>>, vector<1x1x1xf32>
    %249 = vector.shape_cast %248 : vector<1x1x1xf32> to vector<1x1xf32>
    %250 = vector.broadcast %249 : vector<1x1xf32> to vector<8x1xf32>
    %251 = arith.addf %247, %250 : vector<8x1xf32>
    %c0_139 = arith.constant 0 : index
    %c1_140 = arith.constant 1 : index
    %252 = vector.load %arg18[%c0_139, %c1_140] : memref<8x2xf32, #tpu.memory_space<vmem>>, vector<8x1xf32>
    tpu.vector_store %arg18[%c0_139, %c1_140], %251 {strides = array<i32>} : memref<8x2xf32, #tpu.memory_space<vmem>>, vector<8x1xf32>,
    return
  }
  func.func @transform_0(%arg0: i32) -> (i32, i32) {
    %c0_i32 = arith.constant 0 : i32
    %c0_i32_0 = arith.constant 0 : i32
    return %arg0, %c0_i32 : i32, i32
  }
  func.func @transform_1(%arg0: i32) -> (i32, i32) {
    %c0_i32 = arith.constant 0 : i32
    %c0_i32_0 = arith.constant 0 : i32
    return %arg0, %c0_i32 : i32, i32
  }
  func.func @transform_2(%arg0: i32) -> (i32, i32, i32) {
    %c0_i32 = arith.constant 0 : i32
    %c0_i32_0 = arith.constant 0 : i32
    %c0_i32_1 = arith.constant 0 : i32
    %c0_i32_2 = arith.constant 0 : i32
    return %c0_i32, %c0_i32_0, %c0_i32_1 : i32, i32, i32
  }
  func.func @transform_3(%arg0: i32) -> (i32, i32, i32) {
    %c0_i32 = arith.constant 0 : i32
    %c0_i32_0 = arith.constant 0 : i32
    %c0_i32_1 = arith.constant 0 : i32
    %c0_i32_2 = arith.constant 0 : i32
    return %c0_i32, %c0_i32_0, %c0_i32_1 : i32, i32, i32
  }
  func.func @transform_4(%arg0: i32) -> (i32, i32, i32) {
    %c0_i32 = arith.constant 0 : i32
    %c0_i32_0 = arith.constant 0 : i32
    %c0_i32_1 = arith.constant 0 : i32
    %c0_i32_2 = arith.constant 0 : i32
    return %c0_i32, %c0_i32_0, %c0_i32_1 : i32, i32, i32
  }
  func.func @transform_5(%arg0: i32) -> (i32, i32, i32) {
    %c0_i32 = arith.constant 0 : i32
    %c0_i32_0 = arith.constant 0 : i32
    %c0_i32_1 = arith.constant 0 : i32
    %c0_i32_2 = arith.constant 0 : i32
    return %c0_i32, %c0_i32_0, %c0_i32_1 : i32, i32, i32
  }
  func.func @transform_6(%arg0: i32) -> (i32, i32, i32) {
    %c0_i32 = arith.constant 0 : i32
    %c0_i32_0 = arith.constant 0 : i32
    %c0_i32_1 = arith.constant 0 : i32
    %c0_i32_2 = arith.constant 0 : i32
    return %c0_i32, %c0_i32_0, %c0_i32_1 : i32, i32, i32
  }
  func.func @transform_7(%arg0: i32) -> (i32, i32, i32) {
    %c0_i32 = arith.constant 0 : i32
    %c0_i32_0 = arith.constant 0 : i32
    %c0_i32_1 = arith.constant 0 : i32
    %c0_i32_2 = arith.constant 0 : i32
    return %c0_i32, %c0_i32_0, %c0_i32_1 : i32, i32, i32
  }
  func.func @transform_8(%arg0: i32) -> (i32, i32, i32) {
    %c0_i32 = arith.constant 0 : i32
    %c0_i32_0 = arith.constant 0 : i32
    %c0_i32_1 = arith.constant 0 : i32
    %c0_i32_2 = arith.constant 0 : i32
    return %c0_i32, %c0_i32_0, %c0_i32_1 : i32, i32, i32
  }
  func.func @transform_9(%arg0: i32) -> (i32, i32, i32) {
    %c0_i32 = arith.constant 0 : i32
    %c0_i32_0 = arith.constant 0 : i32
    %c0_i32_1 = arith.constant 0 : i32
    %c0_i32_2 = arith.constant 0 : i32
    return %c0_i32, %c0_i32_0, %c0_i32_1 : i32, i32, i32
  }
  func.func @transform_10(%arg0: i32) -> (i32, i32, i32) {
    %c0_i32 = arith.constant 0 : i32
    %c0_i32_0 = arith.constant 0 : i32
    %c0_i32_1 = arith.constant 0 : i32
    %c0_i32_2 = arith.constant 0 : i32
    return %c0_i32, %c0_i32_0, %c0_i32_1 : i32, i32, i32
  }
  func.func @transform_11(%arg0: i32) -> (i32, i32, i32) {
    %c0_i32 = arith.constant 0 : i32
    %c0_i32_0 = arith.constant 0 : i32
    %c0_i32_1 = arith.constant 0 : i32
    %c0_i32_2 = arith.constant 0 : i32
    return %c0_i32, %c0_i32_0, %c0_i32_1 : i32, i32, i32
  }
  func.func @transform_12(%arg0: i32) -> (i32, i32, i32) {
    %c0_i32 = arith.constant 0 : i32
    %c0_i32_0 = arith.constant 0 : i32
    %c0_i32_1 = arith.constant 0 : i32
    %c0_i32_2 = arith.constant 0 : i32
    return %c0_i32, %c0_i32_0, %c0_i32_1 : i32, i32, i32
  }
  func.func @transform_13(%arg0: i32) -> (i32, i32, i32) {
    %c0_i32 = arith.constant 0 : i32
    %c0_i32_0 = arith.constant 0 : i32
    %c0_i32_1 = arith.constant 0 : i32
    %c0_i32_2 = arith.constant 0 : i32
    return %c0_i32, %c0_i32_0, %c0_i32_1 : i32, i32, i32
  }
  func.func @transform_14(%arg0: i32) -> (i32, i32, i32) {
    %c0_i32 = arith.constant 0 : i32
    %c0_i32_0 = arith.constant 0 : i32
    %c0_i32_1 = arith.constant 0 : i32
    %c0_i32_2 = arith.constant 0 : i32
    return %c0_i32, %c0_i32_0, %c0_i32_1 : i32, i32, i32
  }
  func.func @transform_15(%arg0: i32) -> (i32, i32, i32) {
    %c0_i32 = arith.constant 0 : i32
    %c0_i32_0 = arith.constant 0 : i32
    %c0_i32_1 = arith.constant 0 : i32
    %c0_i32_2 = arith.constant 0 : i32
    return %c0_i32, %c0_i32_0, %c0_i32_1 : i32, i32, i32
  }
  func.func @transform_16(%arg0: i32) -> (i32, i32, i32) {
    %c0_i32 = arith.constant 0 : i32
    %c0_i32_0 = arith.constant 0 : i32
    %c0_i32_1 = arith.constant 0 : i32
    %c0_i32_2 = arith.constant 0 : i32
    return %c0_i32, %c0_i32_0, %c0_i32_1 : i32, i32, i32
  }
  func.func @transform_17(%arg0: i32) -> (i32, i32) {
    %c0_i32 = arith.constant 0 : i32
    %c0_i32_0 = arith.constant 0 : i32
    return %arg0, %c0_i32 : i32, i32
  }
}

</mosaic_0001>

<llo_original>
// kernel: critic_forward.1
$region0: #{critic_forward.1}
  #allocation0 [shape = 'u32[]', space=smem, size = 0x4, offset = 0x4, fixed_abs, tag = 'smem constant byte address 0x4 - core index']
  #allocation1 [shape = 'u32[144,128]{1,0:T(1,128)}', space=vmem, size = 0x12000, scoped, tag = 'internal scratch']
  %s0 = inlined_call_operand.vmem [shape: f32[8,16], index: 0, kind: input, shape index: {}]
  %s1 = inlined_call_operand.vmem [shape: f32[8,4], index: 1, kind: input, shape index: {}]
  %s2 = inlined_call_operand.vmem [shape: bf16[2,16,128], index: 2, kind: input, shape index: {}]
  %s3 = inlined_call_operand.vmem [shape: bf16[2,4,128], index: 3, kind: input, shape index: {}]
  %s4 = inlined_call_operand.vmem [shape: f32[2,1,128], index: 4, kind: input, shape index: {}]
  %s5 = inlined_call_operand.vmem [shape: f32[2,1,128], index: 5, kind: input, shape index: {}]
  %s6 = inlined_call_operand.vmem [shape: f32[2,1,128], index: 6, kind: input, shape index: {}]
  %s7 = inlined_call_operand.hbm [shape: bf16[2,128,128], index: 7, kind: input, shape index: {}]
  %s8 = inlined_call_operand.vmem [shape: f32[2,1,128], index: 8, kind: input, shape index: {}]
  %s9 = inlined_call_operand.vmem [shape: f32[2,1,128], index: 9, kind: input, shape index: {}]
  %s10 = inlined_call_operand.vmem [shape: f32[2,1,128], index: 10, kind: input, shape index: {}]
  %s11 = inlined_call_operand.hbm [shape: bf16[2,128,128], index: 11, kind: input, shape index: {}]
  %s12 = inlined_call_operand.hbm [shape: f32[2,1,128], index: 12, kind: input, shape index: {}]
  %s13 = inlined_call_operand.vmem [shape: f32[2,1,128], index: 13, kind: input, shape index: {}]
  %s14 = inlined_call_operand.vmem [shape: f32[2,1,128], index: 14, kind: input, shape index: {}]
  %s15 = inlined_call_operand.vmem [shape: f32[2,1,128], index: 15, kind: input, shape index: {}]
  %s16 = inlined_call_operand.vmem [shape: f32[2,1,1], index: 16, kind: input, shape index: {}]
  %s17 = inlined_call_operand.vmem [shape: f32[8,2], index: 17, kind: output, shape index: {}]
  %s18 = sld [smem:[#allocation0]]
  $region90: #{critic_forward.1} parent=0
    _
  %s20 = ssub.s32 1, %s18
  %s21 = scalar_select 0, %s20, %s18
  $region1: #{critic_forward.1} parent=0
    #allocation2 [shape = 'u8[65536]{0}', space=vmem, size = 0x10000, scoped, tag = 'input window, operand 7, single buffered']
    #allocation3 [shape = 's32[1]{0}', space=sflag, size = 0x4, scoped, tag = 'scoped memory for critic_forward.1']
    #allocation4 [shape = 'u8[65536]{0}', space=vmem, size = 0x10000, scoped, tag = 'input window, operand 11, single buffered']
    #allocation5 [shape = 's32[1]{0}', space=sflag, size = 0x4, scoped, tag = 'scoped memory for critic_forward.1']
    #allocation6 [shape = 'u8[1024]{0}', space=vmem, size = 0x400, scoped, tag = 'input window, operand 12, single buffered']
    %22 = vsyncpa [#allocation3], 0
    %23 = vsyncpa [#allocation5], 0
    // Predicated region
    $region2: #{critic_forward.1} parent=1 // pred_check
      _
    $region3: #{critic_forward.1} parent=1 // pred_check_branch
      %25 = sbr.rel (0) target = $region5
    $region4: #{critic_forward.1} parent=1 // pred_region
      _
    $region5: #{critic_forward.1} parent=1 // pred_fallthru
      _
    // Predicated region
    $region6: #{critic_forward.1} parent=1 // pred_check
      _
    $region7: #{critic_forward.1} parent=1 // pred_check_branch
      %27 = sbr.rel (0) target = $region9
    $region8: #{critic_forward.1} parent=1 // pred_region
      _
    $region9: #{critic_forward.1} parent=1 // pred_fallthru
      _
    // Predicated region
    $region10: #{critic_forward.1} parent=1 // pred_check
      _
    $region11: #{critic_forward.1} parent=1 // pred_check_branch
      %29 = sbr.rel (0) target = $region13
    $region12: #{critic_forward.1} parent=1 // pred_region
      _
    $region13: #{critic_forward.1} parent=1 // pred_fallthru
      _
    // Predicated region
    $region14: #{critic_forward.1} parent=1 // pred_check
      _
    $region15: #{critic_forward.1} parent=1 // pred_check_branch
      %31 = sbr.rel (0) target = $region17
    $region16: #{critic_forward.1} parent=1 // pred_region
      _
    $region17: #{critic_forward.1} parent=1 // pred_fallthru
      _
    // Predicated region
    $region18: #{critic_forward.1} parent=1 // pred_check
      _
    $region19: #{critic_forward.1} parent=1 // pred_check_branch
      %33 = sbr.rel (0) target = $region21
    $region20: #{critic_forward.1} parent=1 // pred_region
      _
    $region21: #{critic_forward.1} parent=1 // pred_fallthru
      _
    // Predicated region
    $region22: #{critic_forward.1} parent=1 // pred_check
      _
    $region23: #{critic_forward.1} parent=1 // pred_check_branch
      %35 = sbr.rel (0) target = $region25
    $region24: #{critic_forward.1} parent=1 // pred_region
      _
    $region25: #{critic_forward.1} parent=1 // pred_fallthru
      _
    // Predicated region
    $region26: #{critic_forward.1} parent=1 // pred_check
      _
    $region27: #{critic_forward.1} parent=1 // pred_check_branch
      %37 = sbr.rel (0) target = $region29
    $region28: #{critic_forward.1} parent=1 // pred_region
      _
    $region29: #{critic_forward.1} parent=1 // pred_fallthru
      _
    // Predicated region
    $region30: #{critic_forward.1} parent=1 // pred_check
      _
    $region31: #{critic_forward.1} parent=1 // pred_check_branch
      %39 = sbr.rel (0) target = $region33
    $region32: #{critic_forward.1} parent=1 // pred_region
      %s41 = ssub.s32 2048, 2048
      %42 = vsyncadd [#allocation3], %s41
      %s43 = sshll.u32 [#allocation2], 4
      %s44 = int_to_ptr.vmem [resolvable:$true] %s43
      %49 = dma.hbm_to_vmem [thread:$0]  %s7, 2048, %s44, [#allocation3], 64, 64, 4
    $region33: #{critic_forward.1} parent=1 // pred_fallthru
      _
    // Predicated region
    $region34: #{critic_forward.1} parent=1 // pred_check
      _
    $region35: #{critic_forward.1} parent=1 // pred_check_branch
      %51 = sbr.rel (0) target = $region37
    $region36: #{critic_forward.1} parent=1 // pred_region
      _
    $region37: #{critic_forward.1} parent=1 // pred_fallthru
      _
    // Predicated region
    $region38: #{critic_forward.1} parent=1 // pred_check
      _
    $region39: #{critic_forward.1} parent=1 // pred_check_branch
      %53 = sbr.rel (0) target = $region41
    $region40: #{critic_forward.1} parent=1 // pred_region
      _
    $region41: #{critic_forward.1} parent=1 // pred_fallthru
      _
    // Predicated region
    $region42: #{critic_forward.1} parent=1 // pred_check
      _
    $region43: #{critic_forward.1} parent=1 // pred_check_branch
      %55 = sbr.rel (0) target = $region45
    $region44: #{critic_forward.1} parent=1 // pred_region
      _
    $region45: #{critic_forward.1} parent=1 // pred_fallthru
      _
    // Predicated region
    $region46: #{critic_forward.1} parent=1 // pred_check
      _
    $region47: #{critic_forward.1} parent=1 // pred_check_branch
      %57 = sbr.rel (0) target = $region49
    $region48: #{critic_forward.1} parent=1 // pred_region
      %s59 = ssub.s32 2048, 2048
      %60 = vsyncadd [#allocation5], %s59
      %s61 = sshll.u32 [#allocation4], 4
      %s62 = int_to_ptr.vmem [resolvable:$true] %s61
      %67 = dma.hbm_to_vmem [thread:$0]  %s11, 2048, %s62, [#allocation5], 64, 64, 4
    $region49: #{critic_forward.1} parent=1 // pred_fallthru
      _
    // Predicated region
    $region50: #{critic_forward.1} parent=1 // pred_check
      _
    $region51: #{critic_forward.1} parent=1 // pred_check_branch
      %69 = sbr.rel (0) target = $region53
    $region52: #{critic_forward.1} parent=1 // pred_region
      %s71 = ssub.s32 32, 32
      %72 = vsyncadd [#allocation5], %s71
      %s73 = sshll.u32 [#allocation6], 4
      %s74 = int_to_ptr.vmem [resolvable:$true] %s73
      %79 = dma.hbm_to_vmem [thread:$0]  %s12, 32, %s74, [#allocation5], 16, 16, 1
    $region53: #{critic_forward.1} parent=1 // pred_fallthru
      _
    // Predicated region
    $region54: #{critic_forward.1} parent=1 // pred_check
      _
    $region55: #{critic_forward.1} parent=1 // pred_check_branch
      %81 = sbr.rel (0) target = $region57
    $region56: #{critic_forward.1} parent=1 // pred_region
      _
    $region57: #{critic_forward.1} parent=1 // pred_fallthru
      _
    // Predicated region
    $region58: #{critic_forward.1} parent=1 // pred_check
      _
    $region59: #{critic_forward.1} parent=1 // pred_check_branch
      %83 = sbr.rel (0) target = $region61
    $region60: #{critic_forward.1} parent=1 // pred_region
      _
    $region61: #{critic_forward.1} parent=1 // pred_fallthru
      _
    // Predicated region
    $region62: #{critic_forward.1} parent=1 // pred_check
      _
    $region63: #{critic_forward.1} parent=1 // pred_check_branch
      %85 = sbr.rel (0) target = $region65
    $region64: #{critic_forward.1} parent=1 // pred_region
      _
    $region65: #{critic_forward.1} parent=1 // pred_fallthru
      _
    // Predicated region
    $region66: #{critic_forward.1} parent=1 // pred_check
      _
    $region67: #{critic_forward.1} parent=1 // pred_check_branch
      %87 = sbr.rel (0) target = $region69
    $region68: #{critic_forward.1} parent=1 // pred_region
      _
    $region69: #{critic_forward.1} parent=1 // pred_fallthru
      _
    // Predicated region
    $region70: #{critic_forward.1} parent=1 // pred_check
      _
    $region71: #{critic_forward.1} parent=1 // pred_check_branch
      %89 = sbr.rel (0) target = $region73
    $region72: #{critic_forward.1} parent=1 // pred_region
      %90 = dma.done [#allocation3], 2048
    $region73: #{critic_forward.1} parent=1 // pred_fallthru
      _
    // Predicated region
    $region74: #{critic_forward.1} parent=1 // pred_check
      _
    $region75: #{critic_forward.1} parent=1 // pred_check_branch
      %92 = sbr.rel (0) target = $region77
    $region76: #{critic_forward.1} parent=1 // pred_region
      %93 = dma.done [#allocation5], 2048
    $region77: #{critic_forward.1} parent=1 // pred_fallthru
      _
    // Predicated region
    $region78: #{critic_forward.1} parent=1 // pred_check
      _
    $region79: #{critic_forward.1} parent=1 // pred_check_branch
      %95 = sbr.rel (0) target = $region81
    $region80: #{critic_forward.1} parent=1 // pred_region
      %96 = dma.done [#allocation5], 32
    $region81: #{critic_forward.1} parent=1 // pred_fallthru
      _
    %v98 = vlaneseq
    %v99 = vand.u32 %v98, 127
    %vm100 = vcmp.lt.s32.totalorder %v99, 32
    %v101 = vsel %vm100, 1, 0
    %v102 = vcvt.s32.f32 %v101
    %v103 = vld [vmem:[%s0] sm:$0xff]
    %v104 = vpack.c.bf16 %v103, %v103
    %v105 = vld [vmem:[%s1] sm:$0xff]
    %v106 = vpack.c.bf16 %v105, %v105
    %v107 = vld [vmem:[%s2] sm:$0xf]
    %v108 = vld [vmem:[%s2 + $0x4] sm:$0xf]
    %v109 = vld [vmem:[%s3] sm:$0x3]
    %vm110 = vcmask 31744
    %v112 = vsel %vm110, %v106, 0
    %vm114 = vcmask 1041408
    %v116 = vsel %vm114, %v109, 0
    %118 = vmatprep.subr.bf16.mxu0 0
    %119 = vmatpush1.bf16.msra.mxu0 0
    %120 = vmatprep.subr.bf16.mxu0 0
    %121 = vmatpush1.bf16.msra.mxu0 0
    %122 = vmatprep.subr.bf16.mxu0 0
    %123 = vmatpush1.bf16.msra.mxu0 0
    %124 = vmatprep.subr.bf16.mxu0 0
    %125 = vmatpush1.bf16.msra.mxu0 0
    %126 = vmatprep.subr.bf16.mxu0 0
    %127 = vmatpush1.bf16.msra.mxu0 0
    %128 = vmatprep.subr.bf16.mxu0 0
    %129 = vmatpush1.bf16.msra.mxu0 0
    %130 = vmatprep.subr.bf16.mxu0 0
    %131 = vmatpush1.bf16.msra.mxu0 0
    %132 = vmatprep.subr.bf16.mxu0 0
    %133 = vmatpush1.bf16.msra.mxu0 %v116
    %134 = vmatprep.subr.bf16.mxu0 0
    %135 = vmatpush2.bf16.msra.mxu0 0
    %136 = vmatprep.subr.bf16.mxu0 0
    %137 = vmatpush2.bf16.msra.mxu0 0
    %138 = vmatprep.subr.bf16.mxu0 0
    %139 = vmatpush2.bf16.msra.mxu0 0
    %140 = vmatprep.subr.bf16.mxu0 0
    %141 = vmatpush2.bf16.msra.mxu0 0
    %142 = vmatprep.subr.bf16.mxu0 0
    %143 = vmatpush2.bf16.msra.mxu0 0
    %144 = vmatprep.subr.bf16.mxu0 0
    %145 = vmatpush2.bf16.msra.mxu0 0
    %146 = vmatprep.subr.bf16.mxu0 0
    %147 = vmatpush2.bf16.msra.mxu0 0
    %148 = vmatprep.subr.bf16.mxu0 0
    %149 = vmatpush2.bf16.msra.mxu0 0
    %150 = vmatprep.mubr.bf16.mxu0 0
    %151 = vmatmul.mubr.bf16.gmra.mxu0 %v112
    %v152 = vpop.f32.mrf.mxu0
    %v153 = vadd.f32 0.0, %v152
    %v154 = vpop.f32.mrf.mxu0
    %v155 = vpop.f32.mrf.mxu0
    %v156 = vpop.f32.mrf.mxu0
    %157 = vdwg.mxu0
    %v160 = vunpack.c.l.b16 %v107
    %v161 = vunpack.c.l.b16 %v108
    %v162 = vpack.c.b16 %v161, %v160
    %vm164 = vcmask 130048
    %v166 = vsel %vm164, %v104, 0
    %168 = vmatprep.subr.bf16.mxu0 0
    %169 = vmatpush1.bf16.msra.mxu0 0
    %170 = vmatprep.subr.bf16.mxu0 0
    %171 = vmatpush1.bf16.msra.mxu0 0
    %172 = vmatprep.subr.bf16.mxu0 0
    %173 = vmatpush1.bf16.msra.mxu0 0
    %174 = vmatprep.subr.bf16.mxu0 0
    %175 = vmatpush1.bf16.msra.mxu0 0
    %176 = vmatprep.subr.bf16.mxu0 0
    %177 = vmatpush1.bf16.msra.mxu0 0
    %178 = vmatprep.subr.bf16.mxu0 0
    %179 = vmatpush1.bf16.msra.mxu0 0
    %180 = vmatprep.subr.bf16.mxu0 0
    %181 = vmatpush1.bf16.msra.mxu0 0
    %182 = vmatprep.subr.bf16.mxu0 0
    %183 = vmatpush1.bf16.msra.mxu0 %v162
    %184 = vmatprep.subr.bf16.mxu0 0
    %185 = vmatpush2.bf16.msra.mxu0 0
    %186 = vmatprep.subr.bf16.mxu0 0
    %187 = vmatpush2.bf16.msra.mxu0 0
    %188 = vmatprep.subr.bf16.mxu0 0
    %189 = vmatpush2.bf16.msra.mxu0 0
    %190 = vmatprep.subr.bf16.mxu0 0
    %191 = vmatpush2.bf16.msra.mxu0 0
    %192 = vmatprep.subr.bf16.mxu0 0
    %193 = vmatpush2.bf16.msra.mxu0 0
    %194 = vmatprep.subr.bf16.mxu0 0
    %195 = vmatpush2.bf16.msra.mxu0 0
    %196 = vmatprep.subr.bf16.mxu0 0
    %197 = vmatpush2.bf16.msra.mxu0 0
    %198 = vmatprep.subr.bf16.mxu0 0
    %199 = vmatpush2.bf16.msra.mxu0 0
    %200 = vmatprep.mubr.bf16.mxu0 0
    %201 = vmatmul.mubr.bf16.gmra.mxu0 %v166
    %v202 = vpop.f32.mrf.mxu0
    %v203 = vadd.f32 %v153, %v202
    %v204 = vpop.f32.mrf.mxu0
    %v205 = vpop.f32.mrf.mxu0
    %v206 = vpop.f32.mrf.mxu0
    %207 = vdwg.mxu0
    %v208 = vld [vmem:[%s4] sm:$0x1]
    %v210 = vlaneseq
    %v211 = vshrl.u32 %v210, 7
    %v212 = vsub.s32 0, %v211
    %v213 = vrot.slane %v208, %v212
    %v215 = vadd.f32 %v203, %v213
    %v216 = vld [vmem:[%s5] sm:$0x1]
    %v217 = vld [vmem:[%s6] sm:$0x1]
    %v218 = vmax.f32 %v215, 0.0
    %219 = vadd.xlane.f32.xlu0 %v218
    %v220 = vpop.xlane.xlu0 %219
    %v221 = vmul.f32 %v220, 0.03125
    %v222 = vsub.f32 %v218, %v221
    %v223 = vmul.f32 %v222, %v102
    %v224 = vmul.f32 %v223, %v223
    %225 = vadd.xlane.f32.xlu0 %v224
    %v226 = vpop.xlane.xlu0 %225
    %v227 = vmul.f32 %v226, 0.03125
    %v228 = vadd.f32 %v227, 1e-05
    %v229 = vrsqrt.pop %v228
    %v230 = vmul.f32 %v223, %v229
    %v232 = vlaneseq
    %v233 = vshrl.u32 %v232, 7
    %v234 = vsub.s32 0, %v233
    %v235 = vrot.slane %v216, %v234
    %v237 = vmul.f32 %v230, %v235
    %v239 = vlaneseq
    %v240 = vshrl.u32 %v239, 7
    %v241 = vsub.s32 0, %v240
    %v242 = vrot.slane %v217, %v241
    %v244 = vadd.f32 %v237, %v242
    %v245 = vpack.c.bf16 %v244, %v244
    %v246 = vld [vmem:[#allocation2] sm:$0xf]
    %v247 = vld [vmem:[#allocation2 + $0x4] sm:$0xf]
    %v248 = vld [vmem:[#allocation2 + $0x8] sm:$0xf]
    %v249 = vld [vmem:[#allocation2 + $0xc] sm:$0xf]
    %v250 = vld [vmem:[#allocation2 + $0x10] sm:$0xf]
    %v251 = vld [vmem:[#allocation2 + $0x14] sm:$0xf]
    %v252 = vld [vmem:[#allocation2 + $0x18] sm:$0xf]
    %v253 = vld [vmem:[#allocation2 + $0x1c] sm:$0xf]
    %v254 = vld [vmem:[#allocation2 + $0x20] sm:$0xf]
    %v255 = vld [vmem:[#allocation2 + $0x24] sm:$0xf]
    %v256 = vld [vmem:[#allocation2 + $0x28] sm:$0xf]
    %v257 = vld [vmem:[#allocation2 + $0x2c] sm:$0xf]
    %v258 = vld [vmem:[#allocation2 + $0x30] sm:$0xf]
    %v259 = vld [vmem:[#allocation2 + $0x34] sm:$0xf]
    %v260 = vld [vmem:[#allocation2 + $0x38] sm:$0xf]
    %v261 = vld [vmem:[#allocation2 + $0x3c] sm:$0xf]
    %v262 = vld [vmem:[%s8] sm:$0x1]
    %v264 = vlaneseq
    %v265 = vshrl.u32 %v264, 7
    %v266 = vsub.s32 0, %v265
    %v267 = vrot.slane %v262, %v266
    %v285 = vunpack.c.l.b16 %v246
    %v286 = vunpack.c.l.b16 %v247
    %v287 = vunpack.c.l.b16 %v248
    %v288 = vunpack.c.l.b16 %v249
    %v289 = vunpack.c.l.b16 %v250
    %v290 = vunpack.c.l.b16 %v251
    %v291 = vunpack.c.l.b16 %v252
    %v292 = vunpack.c.l.b16 %v253
    %v293 = vunpack.c.l.b16 %v254
    %v294 = vunpack.c.l.b16 %v255
    %v295 = vunpack.c.l.b16 %v256
    %v296 = vunpack.c.l.b16 %v257
    %v297 = vunpack.c.l.b16 %v258
    %v298 = vunpack.c.l.b16 %v259
    %v299 = vunpack.c.l.b16 %v260
    %v300 = vunpack.c.l.b16 %v261
    %v301 = vpack.c.b16 %v286, %v285
    %v302 = vpack.c.b16 %v288, %v287
    %v303 = vpack.c.b16 %v290, %v289
    %v304 = vpack.c.b16 %v292, %v291
    %v305 = vpack.c.b16 %v294, %v293
    %v306 = vpack.c.b16 %v296, %v295
    %v307 = vpack.c.b16 %v298, %v297
    %v308 = vpack.c.b16 %v300, %v299
    %317 = vmatprep.subr.bf16.mxu0 0
    %318 = vmatpush1.bf16.msra.mxu0 %v308
    %319 = vmatprep.subr.bf16.mxu0 0
    %320 = vmatpush1.bf16.msra.mxu0 %v307
    %321 = vmatprep.subr.bf16.mxu0 0
    %322 = vmatpush1.bf16.msra.mxu0 %v306
    %323 = vmatprep.subr.bf16.mxu0 0
    %324 = vmatpush1.bf16.msra.mxu0 %v305
    %325 = vmatprep.subr.bf16.mxu0 0
    %326 = vmatpush1.bf16.msra.mxu0 %v304
    %327 = vmatprep.subr.bf16.mxu0 0
    %328 = vmatpush1.bf16.msra.mxu0 %v303
    %329 = vmatprep.subr.bf16.mxu0 0
    %330 = vmatpush1.bf16.msra.mxu0 %v302
    %331 = vmatprep.subr.bf16.mxu0 0
    %332 = vmatpush1.bf16.msra.mxu0 %v301
    %333 = vmatprep.subr.bf16.mxu0 0
    %334 = vmatpush2.bf16.msra.mxu0 0
    %335 = vmatprep.subr.bf16.mxu0 0
    %336 = vmatpush2.bf16.msra.mxu0 0
    %337 = vmatprep.subr.bf16.mxu0 0
    %338 = vmatpush2.bf16.msra.mxu0 0
    %339 = vmatprep.subr.bf16.mxu0 0
    %340 = vmatpush2.bf16.msra.mxu0 0
    %341 = vmatprep.subr.bf16.mxu0 0
    %342 = vmatpush2.bf16.msra.mxu0 0
    %343 = vmatprep.subr.bf16.mxu0 0
    %344 = vmatpush2.bf16.msra.mxu0 0
    %345 = vmatprep.subr.bf16.mxu0 0
    %346 = vmatpush2.bf16.msra.mxu0 0
    %347 = vmatprep.subr.bf16.mxu0 0
    %348 = vmatpush2.bf16.msra.mxu0 0
    %349 = vmatprep.mubr.bf16.mxu0 0
    %350 = vmatmul.mubr.bf16.gmra.mxu0 %v245
    %v351 = vpop.f32.mrf.mxu0
    %v352 = vadd.f32 %v267, %v351
    %v353 = vpop.f32.mrf.mxu0
    %v354 = vpop.f32.mrf.mxu0
    %v355 = vpop.f32.mrf.mxu0
    %356 = vdwg.mxu0
    %v357 = vld [vmem:[%s9] sm:$0x1]
    %v358 = vld [vmem:[%s10] sm:$0x1]
    %v359 = vmax.f32 %v352, 0.0
    %360 = vadd.xlane.f32.xlu0 %v359
    %v361 = vpop.xlane.xlu0 %360
    %v362 = vmul.f32 %v361, 0.03125
    %v363 = vsub.f32 %v359, %v362
    %v364 = vmul.f32 %v363, %v102
    %v365 = vmul.f32 %v364, %v364
    %366 = vadd.xlane.f32.xlu0 %v365
    %v367 = vpop.xlane.xlu0 %366
    %v368 = vmul.f32 %v367, 0.03125
    %v369 = vadd.f32 %v368, 1e-05
    %v370 = vrsqrt.pop %v369
    %v371 = vmul.f32 %v364, %v370
    %v373 = vlaneseq
    %v374 = vshrl.u32 %v373, 7
    %v375 = vsub.s32 0, %v374
    %v376 = vrot.slane %v357, %v375
    %v378 = vmul.f32 %v371, %v376
    %v380 = vlaneseq
    %v381 = vshrl.u32 %v380, 7
    %v382 = vsub.s32 0, %v381
    %v383 = vrot.slane %v358, %v382
    %v385 = vadd.f32 %v378, %v383
    %v386 = vpack.c.bf16 %v385, %v385
    %v387 = vld [vmem:[#allocation4] sm:$0xf]
    %v388 = vld [vmem:[#allocation4 + $0x4] sm:$0xf]
    %v389 = vld [vmem:[#allocation4 + $0x8] sm:$0xf]
    %v390 = vld [vmem:[#allocation4 + $0xc] sm:$0xf]
    %v391 = vld [vmem:[#allocation4 + $0x10] sm:$0xf]
    %v392 = vld [vmem:[#allocation4 + $0x14] sm:$0xf]
    %v393 = vld [vmem:[#allocation4 + $0x18] sm:$0xf]
    %v394 = vld [vmem:[#allocation4 + $0x1c] sm:$0xf]
    %v395 = vld [vmem:[#allocation4 + $0x20] sm:$0xf]
    %v396 = vld [vmem:[#allocation4 + $0x24] sm:$0xf]
    %v397 = vld [vmem:[#allocation4 + $0x28] sm:$0xf]
    %v398 = vld [vmem:[#allocation4 + $0x2c] sm:$0xf]
    %v399 = vld [vmem:[#allocation4 + $0x30] sm:$0xf]
    %v400 = vld [vmem:[#allocation4 + $0x34] sm:$0xf]
    %v401 = vld [vmem:[#allocation4 + $0x38] sm:$0xf]
    %v402 = vld [vmem:[#allocation4 + $0x3c] sm:$0xf]
    %v403 = vld [vmem:[#allocation6] sm:$0x1]
    %v405 = vlaneseq
    %v406 = vshrl.u32 %v405, 7
    %v407 = vsub.s32 0, %v406
    %v408 = vrot.slane %v403, %v407
    %v426 = vunpack.c.l.b16 %v387
    %v427 = vunpack.c.l.b16 %v388
    %v428 = vunpack.c.l.b16 %v389
    %v429 = vunpack.c.l.b16 %v390
    %v430 = vunpack.c.l.b16 %v391
    %v431 = vunpack.c.l.b16 %v392
    %v432 = vunpack.c.l.b16 %v393
    %v433 = vunpack.c.l.b16 %v394
    %v434 = vunpack.c.l.b16 %v395
    %v435 = vunpack.c.l.b16 %v396
    %v436 = vunpack.c.l.b16 %v397
    %v437 = vunpack.c.l.b16 %v398
    %v438 = vunpack.c.l.b16 %v399
    %v439 = vunpack.c.l.b16 %v400
    %v440 = vunpack.c.l.b16 %v401
    %v441 = vunpack.c.l.b16 %v402
    %v442 = vpack.c.b16 %v427, %v426
    %v443 = vpack.c.b16 %v429, %v428
    %v444 = vpack.c.b16 %v431, %v430
    %v445 = vpack.c.b16 %v433, %v432
    %v446 = vpack.c.b16 %v435, %v434
    %v447 = vpack.c.b16 %v437, %v436
    %v448 = vpack.c.b16 %v439, %v438
    %v449 = vpack.c.b16 %v441, %v440
    %458 = vmatprep.subr.bf16.mxu0 0
    %459 = vmatpush1.bf16.msra.mxu0 %v449
    %460 = vmatprep.subr.bf16.mxu0 0
    %461 = vmatpush1.bf16.msra.mxu0 %v448
    %462 = vmatprep.subr.bf16.mxu0 0
    %463 = vmatpush1.bf16.msra.mxu0 %v447
    %464 = vmatprep.subr.bf16.mxu0 0
    %465 = vmatpush1.bf16.msra.mxu0 %v446
    %466 = vmatprep.subr.bf16.mxu0 0
    %467 = vmatpush1.bf16.msra.mxu0 %v445
    %468 = vmatprep.subr.bf16.mxu0 0
    %469 = vmatpush1.bf16.msra.mxu0 %v444
    %470 = vmatprep.subr.bf16.mxu0 0
    %471 = vmatpush1.bf16.msra.mxu0 %v443
    %472 = vmatprep.subr.bf16.mxu0 0
    %473 = vmatpush1.bf16.msra.mxu0 %v442
    %474 = vmatprep.subr.bf16.mxu0 0
    %475 = vmatpush2.bf16.msra.mxu0 0
    %476 = vmatprep.subr.bf16.mxu0 0
    %477 = vmatpush2.bf16.msra.mxu0 0
    %478 = vmatprep.subr.bf16.mxu0 0
    %479 = vmatpush2.bf16.msra.mxu0 0
    %480 = vmatprep.subr.bf16.mxu0 0
    %481 = vmatpush2.bf16.msra.mxu0 0
    %482 = vmatprep.subr.bf16.mxu0 0
    %483 = vmatpush2.bf16.msra.mxu0 0
    %484 = vmatprep.subr.bf16.mxu0 0
    %485 = vmatpush2.bf16.msra.mxu0 0
    %486 = vmatprep.subr.bf16.mxu0 0
    %487 = vmatpush2.bf16.msra.mxu0 0
    %488 = vmatprep.subr.bf16.mxu0 0
    %489 = vmatpush2.bf16.msra.mxu0 0
    %490 = vmatprep.mubr.bf16.mxu0 0
    %491 = vmatmul.mubr.bf16.gmra.mxu0 %v386
    %v492 = vpop.f32.mrf.mxu0
    %v493 = vadd.f32 %v408, %v492
    %v494 = vpop.f32.mrf.mxu0
    %v495 = vpop.f32.mrf.mxu0
    %v496 = vpop.f32.mrf.mxu0
    %497 = vdwg.mxu0
    %v498 = vld [vmem:[%s13] sm:$0x1]
    %v499 = vld [vmem:[%s14] sm:$0x1]
    %v500 = vmax.f32 %v493, 0.0
    %501 = vadd.xlane.f32.xlu0 %v500
    %v502 = vpop.xlane.xlu0 %501
    %v503 = vmul.f32 %v502, 0.03125
    %v504 = vsub.f32 %v500, %v503
    %v505 = vmul.f32 %v504, %v102
    %v506 = vmul.f32 %v505, %v505
    %507 = vadd.xlane.f32.xlu0 %v506
    %v508 = vpop.xlane.xlu0 %507
    %v509 = vmul.f32 %v508, 0.03125
    %v510 = vadd.f32 %v509, 1e-05
    %v511 = vrsqrt.pop %v510
    %v512 = vmul.f32 %v505, %v511
    %v514 = vlaneseq
    %v515 = vshrl.u32 %v514, 7
    %v516 = vsub.s32 0, %v515
    %v517 = vrot.slane %v498, %v516
    %v519 = vmul.f32 %v512, %v517
    %v521 = vlaneseq
    %v522 = vshrl.u32 %v521, 7
    %v523 = vsub.s32 0, %v522
    %v524 = vrot.slane %v499, %v523
    %v526 = vadd.f32 %v519, %v524
    %v527 = vld [vmem:[%s15] sm:$0x1]
    %v529 = vlaneseq
    %v530 = vshrl.u32 %v529, 7
    %v531 = vsub.s32 0, %v530
    %v532 = vrot.slane %v527, %v531
    %v534 = vmul.f32 %v526, %v532
    %535 = vadd.xlane.f32.xlu0 %v534
    %v536 = vpop.xlane.xlu0 %535
    %v537 = vld [vmem:[%s16] sm:$0x1]
    %v539 = vlaneseq
    %v540 = vshrl.u32 %v539, 7
    %v541 = vsub.s32 0, %v540
    %v542 = vrot.slane %v537, %v541
    %v544 = vadd.f32 %v536, %v542
    %vm545 = vcmask 7168
    %546 = vst.msk [vmem:[%s17] sm:$0xff] %vm545, %v544
    %s547 = scalar_lea.vmem %s2, 8
    %v548 = vld [vmem:[%s547] sm:$0xf]
    %v549 = vld [vmem:[%s547 + $0x4] sm:$0xf]
    %s550 = scalar_lea.vmem %s3, 2
    %v551 = vld [vmem:[%s550] sm:$0x3]
    %v553 = vsel %vm114, %v551, 0
    %555 = vmatprep.subr.bf16.mxu0 0
    %556 = vmatpush1.bf16.msra.mxu0 0
    %557 = vmatprep.subr.bf16.mxu0 0
    %558 = vmatpush1.bf16.msra.mxu0 0
    %559 = vmatprep.subr.bf16.mxu0 0
    %560 = vmatpush1.bf16.msra.mxu0 0
    %561 = vmatprep.subr.bf16.mxu0 0
    %562 = vmatpush1.bf16.msra.mxu0 0
    %563 = vmatprep.subr.bf16.mxu0 0
    %564 = vmatpush1.bf16.msra.mxu0 0
    %565 = vmatprep.subr.bf16.mxu0 0
    %566 = vmatpush1.bf16.msra.mxu0 0
    %567 = vmatprep.subr.bf16.mxu0 0
    %568 = vmatpush1.bf16.msra.mxu0 0
    %569 = vmatprep.subr.bf16.mxu0 0
    %570 = vmatpush1.bf16.msra.mxu0 %v553
    %571 = vmatprep.subr.bf16.mxu0 0
    %572 = vmatpush2.bf16.msra.mxu0 0
    %573 = vmatprep.subr.bf16.mxu0 0
    %574 = vmatpush2.bf16.msra.mxu0 0
    %575 = vmatprep.subr.bf16.mxu0 0
    %576 = vmatpush2.bf16.msra.mxu0 0
    %577 = vmatprep.subr.bf16.mxu0 0
    %578 = vmatpush2.bf16.msra.mxu0 0
    %579 = vmatprep.subr.bf16.mxu0 0
    %580 = vmatpush2.bf16.msra.mxu0 0
    %581 = vmatprep.subr.bf16.mxu0 0
    %582 = vmatpush2.bf16.msra.mxu0 0
    %583 = vmatprep.subr.bf16.mxu0 0
    %584 = vmatpush2.bf16.msra.mxu0 0
    %585 = vmatprep.subr.bf16.mxu0 0
    %586 = vmatpush2.bf16.msra.mxu0 0
    %587 = vmatprep.mubr.bf16.mxu0 0
    %588 = vmatmul.mubr.bf16.gmra.mxu0 %v112
    %v589 = vpop.f32.mrf.mxu0
    %v590 = vadd.f32 0.0, %v589
    %v591 = vpop.f32.mrf.mxu0
    %v592 = vpop.f32.mrf.mxu0
    %v593 = vpop.f32.mrf.mxu0
    %594 = vdwg.mxu0
    %v597 = vunpack.c.l.b16 %v548
    %v598 = vunpack.c.l.b16 %v549
    %v599 = vpack.c.b16 %v598, %v597
    %601 = vmatprep.subr.bf16.mxu0 0
    %602 = vmatpush1.bf16.msra.mxu0 0
    %603 = vmatprep.subr.bf16.mxu0 0
    %604 = vmatpush1.bf16.msra.mxu0 0
    %605 = vmatprep.subr.bf16.mxu0 0
    %606 = vmatpush1.bf16.msra.mxu0 0
    %607 = vmatprep.subr.bf16.mxu0 0
    %608 = vmatpush1.bf16.msra.mxu0 0
    %609 = vmatprep.subr.bf16.mxu0 0
    %610 = vmatpush1.bf16.msra.mxu0 0
    %611 = vmatprep.subr.bf16.mxu0 0
    %612 = vmatpush1.bf16.msra.mxu0 0
    %613 = vmatprep.subr.bf16.mxu0 0
    %614 = vmatpush1.bf16.msra.mxu0 0
    %615 = vmatprep.subr.bf16.mxu0 0
    %616 = vmatpush1.bf16.msra.mxu0 %v599
    %617 = vmatprep.subr.bf16.mxu0 0
    %618 = vmatpush2.bf16.msra.mxu0 0
    %619 = vmatprep.subr.bf16.mxu0 0
    %620 = vmatpush2.bf16.msra.mxu0 0
    %621 = vmatprep.subr.bf16.mxu0 0
    %622 = vmatpush2.bf16.msra.mxu0 0
    %623 = vmatprep.subr.bf16.mxu0 0
    %624 = vmatpush2.bf16.msra.mxu0 0
    %625 = vmatprep.subr.bf16.mxu0 0
    %626 = vmatpush2.bf16.msra.mxu0 0
    %627 = vmatprep.subr.bf16.mxu0 0
    %628 = vmatpush2.bf16.msra.mxu0 0
    %629 = vmatprep.subr.bf16.mxu0 0
    %630 = vmatpush2.bf16.msra.mxu0 0
    %631 = vmatprep.subr.bf16.mxu0 0
    %632 = vmatpush2.bf16.msra.mxu0 0
    %633 = vmatprep.mubr.bf16.mxu0 0
    %634 = vmatmul.mubr.bf16.gmra.mxu0 %v166
    %v635 = vpop.f32.mrf.mxu0
    %v636 = vadd.f32 %v590, %v635
    %v637 = vpop.f32.mrf.mxu0
    %v638 = vpop.f32.mrf.mxu0
    %v639 = vpop.f32.mrf.mxu0
    %640 = vdwg.mxu0
    %s641 = scalar_lea.vmem %s4, 1
    %v642 = vld [vmem:[%s641] sm:$0x1]
    %v644 = vlaneseq
    %v645 = vshrl.u32 %v644, 7
    %v646 = vsub.s32 0, %v645
    %v647 = vrot.slane %v642, %v646
    %v649 = vadd.f32 %v636, %v647
    %s650 = scalar_lea.vmem %s5, 1
    %v651 = vld [vmem:[%s650] sm:$0x1]
    %s652 = scalar_lea.vmem %s6, 1
    %v653 = vld [vmem:[%s652] sm:$0x1]
    %v654 = vmax.f32 %v649, 0.0
    %655 = vadd.xlane.f32.xlu0 %v654
    %v656 = vpop.xlane.xlu0 %655
    %v657 = vmul.f32 %v656, 0.03125
    %v658 = vsub.f32 %v654, %v657
    %v659 = vmul.f32 %v658, %v102
    %v660 = vmul.f32 %v659, %v659
    %661 = vadd.xlane.f32.xlu0 %v660
    %v662 = vpop.xlane.xlu0 %661
    %v663 = vmul.f32 %v662, 0.03125
    %v664 = vadd.f32 %v663, 1e-05
    %v665 = vrsqrt.pop %v664
    %v666 = vmul.f32 %v659, %v665
    %v668 = vlaneseq
    %v669 = vshrl.u32 %v668, 7
    %v670 = vsub.s32 0, %v669
    %v671 = vrot.slane %v651, %v670
    %v673 = vmul.f32 %v666, %v671
    %v675 = vlaneseq
    %v676 = vshrl.u32 %v675, 7
    %v677 = vsub.s32 0, %v676
    %v678 = vrot.slane %v653, %v677
    %v680 = vadd.f32 %v673, %v678
    %v681 = vpack.c.bf16 %v680, %v680
    %s682 = scalar_lea.vmem [#allocation2], 64
    %v683 = vld [vmem:[%s682] sm:$0xf]
    %v684 = vld [vmem:[%s682 + $0x4] sm:$0xf]
    %v685 = vld [vmem:[%s682 + $0x8] sm:$0xf]
    %v686 = vld [vmem:[%s682 + $0xc] sm:$0xf]
    %v687 = vld [vmem:[%s682 + $0x10] sm:$0xf]
    %v688 = vld [vmem:[%s682 + $0x14] sm:$0xf]
    %v689 = vld [vmem:[%s682 + $0x18] sm:$0xf]
    %v690 = vld [vmem:[%s682 + $0x1c] sm:$0xf]
    %v691 = vld [vmem:[%s682 + $0x20] sm:$0xf]
    %v692 = vld [vmem:[%s682 + $0x24] sm:$0xf]
    %v693 = vld [vmem:[%s682 + $0x28] sm:$0xf]
    %v694 = vld [vmem:[%s682 + $0x2c] sm:$0xf]
    %v695 = vld [vmem:[%s682 + $0x30] sm:$0xf]
    %v696 = vld [vmem:[%s682 + $0x34] sm:$0xf]
    %v697 = vld [vmem:[%s682 + $0x38] sm:$0xf]
    %v698 = vld [vmem:[%s682 + $0x3c] sm:$0xf]
    %s699 = scalar_lea.vmem %s8, 1
    %v700 = vld [vmem:[%s699] sm:$0x1]
    %v702 = vlaneseq
    %v703 = vshrl.u32 %v702, 7
    %v704 = vsub.s32 0, %v703
    %v705 = vrot.slane %v700, %v704
    %v723 = vunpack.c.l.b16 %v683
    %v724 = vunpack.c.l.b16 %v684
    %v725 = vunpack.c.l.b16 %v685
    %v726 = vunpack.c.l.b16 %v686
    %v727 = vunpack.c.l.b16 %v687
    %v728 = vunpack.c.l.b16 %v688
    %v729 = vunpack.c.l.b16 %v689
    %v730 = vunpack.c.l.b16 %v690
    %v731 = vunpack.c.l.b16 %v691
    %v732 = vunpack.c.l.b16 %v692
    %v733 = vunpack.c.l.b16 %v693
    %v734 = vunpack.c.l.b16 %v694
    %v735 = vunpack.c.l.b16 %v695
    %v736 = vunpack.c.l.b16 %v696
    %v737 = vunpack.c.l.b16 %v697
    %v738 = vunpack.c.l.b16 %v698
    %v739 = vpack.c.b16 %v724, %v723
    %v740 = vpack.c.b16 %v726, %v725
    %v741 = vpack.c.b16 %v728, %v727
    %v742 = vpack.c.b16 %v730, %v729
    %v743 = vpack.c.b16 %v732, %v731
    %v744 = vpack.c.b16 %v734, %v733
    %v745 = vpack.c.b16 %v736, %v735
    %v746 = vpack.c.b16 %v738, %v737
    %755 = vmatprep.subr.bf16.mxu0 0
    %756 = vmatpush1.bf16.msra.mxu0 %v746
    %757 = vmatprep.subr.bf16.mxu0 0
    %758 = vmatpush1.bf16.msra.mxu0 %v745
    %759 = vmatprep.subr.bf16.mxu0 0
    %760 = vmatpush1.bf16.msra.mxu0 %v744
    %761 = vmatprep.subr.bf16.mxu0 0
    %762 = vmatpush1.bf16.msra.mxu0 %v743
    %763 = vmatprep.subr.bf16.mxu0 0
    %764 = vmatpush1.bf16.msra.mxu0 %v742
    %765 = vmatprep.subr.bf16.mxu0 0
    %766 = vmatpush1.bf16.msra.mxu0 %v741
    %767 = vmatprep.subr.bf16.mxu0 0
    %768 = vmatpush1.bf16.msra.mxu0 %v740
    %769 = vmatprep.subr.bf16.mxu0 0
    %770 = vmatpush1.bf16.msra.mxu0 %v739
    %771 = vmatprep.subr.bf16.mxu0 0
    %772 = vmatpush2.bf16.msra.mxu0 0
    %773 = vmatprep.subr.bf16.mxu0 0
    %774 = vmatpush2.bf16.msra.mxu0 0
    %775 = vmatprep.subr.bf16.mxu0 0
    %776 = vmatpush2.bf16.msra.mxu0 0
    %777 = vmatprep.subr.bf16.mxu0 0
    %778 = vmatpush2.bf16.msra.mxu0 0
    %779 = vmatprep.subr.bf16.mxu0 0
    %780 = vmatpush2.bf16.msra.mxu0 0
    %781 = vmatprep.subr.bf16.mxu0 0
    %782 = vmatpush2.bf16.msra.mxu0 0
    %783 = vmatprep.subr.bf16.mxu0 0
    %784 = vmatpush2.bf16.msra.mxu0 0
    %785 = vmatprep.subr.bf16.mxu0 0
    %786 = vmatpush2.bf16.msra.mxu0 0
    %787 = vmatprep.mubr.bf16.mxu0 0
    %788 = vmatmul.mubr.bf16.gmra.mxu0 %v681
    %v789 = vpop.f32.mrf.mxu0
    %v790 = vadd.f32 %v705, %v789
    %v791 = vpop.f32.mrf.mxu0
    %v792 = vpop.f32.mrf.mxu0
    %v793 = vpop.f32.mrf.mxu0
    %794 = vdwg.mxu0
    %s795 = scalar_lea.vmem %s9, 1
    %v796 = vld [vmem:[%s795] sm:$0x1]
    %s797 = scalar_lea.vmem %s10, 1
    %v798 = vld [vmem:[%s797] sm:$0x1]
    %v799 = vmax.f32 %v790, 0.0
    %800 = vadd.xlane.f32.xlu0 %v799
    %v801 = vpop.xlane.xlu0 %800
    %v802 = vmul.f32 %v801, 0.03125
    %v803 = vsub.f32 %v799, %v802
    %v804 = vmul.f32 %v803, %v102
    %v805 = vmul.f32 %v804, %v804
    %806 = vadd.xlane.f32.xlu0 %v805
    %v807 = vpop.xlane.xlu0 %806
    %v808 = vmul.f32 %v807, 0.03125
    %v809 = vadd.f32 %v808, 1e-05
    %v810 = vrsqrt.pop %v809
    %v811 = vmul.f32 %v804, %v810
    %v813 = vlaneseq
    %v814 = vshrl.u32 %v813, 7
    %v815 = vsub.s32 0, %v814
    %v816 = vrot.slane %v796, %v815
    %v818 = vmul.f32 %v811, %v816
    %v820 = vlaneseq
    %v821 = vshrl.u32 %v820, 7
    %v822 = vsub.s32 0, %v821
    %v823 = vrot.slane %v798, %v822
    %v825 = vadd.f32 %v818, %v823
    %v826 = vpack.c.bf16 %v825, %v825
    %s827 = scalar_lea.vmem [#allocation4], 64
    %v828 = vld [vmem:[%s827] sm:$0xf]
    %v829 = vld [vmem:[%s827 + $0x4] sm:$0xf]
    %v830 = vld [vmem:[%s827 + $0x8] sm:$0xf]
    %v831 = vld [vmem:[%s827 + $0xc] sm:$0xf]
    %v832 = vld [vmem:[%s827 + $0x10] sm:$0xf]
    %v833 = vld [vmem:[%s827 + $0x14] sm:$0xf]
    %v834 = vld [vmem:[%s827 + $0x18] sm:$0xf]
    %v835 = vld [vmem:[%s827 + $0x1c] sm:$0xf]
    %v836 = vld [vmem:[%s827 + $0x20] sm:$0xf]
    %v837 = vld [vmem:[%s827 + $0x24] sm:$0xf]
    %v838 = vld [vmem:[%s827 + $0x28] sm:$0xf]
    %v839 = vld [vmem:[%s827 + $0x2c] sm:$0xf]
    %v840 = vld [vmem:[%s827 + $0x30] sm:$0xf]
    %v841 = vld [vmem:[%s827 + $0x34] sm:$0xf]
    %v842 = vld [vmem:[%s827 + $0x38] sm:$0xf]
    %v843 = vld [vmem:[%s827 + $0x3c] sm:$0xf]
    %s844 = scalar_lea.vmem [#allocation6], 1
    %v845 = vld [vmem:[%s844] sm:$0x1]
    %v847 = vlaneseq
    %v848 = vshrl.u32 %v847, 7
    %v849 = vsub.s32 0, %v848
    %v850 = vrot.slane %v845, %v849
    %v868 = vunpack.c.l.b16 %v828
    %v869 = vunpack.c.l.b16 %v829
    %v870 = vunpack.c.l.b16 %v830
    %v871 = vunpack.c.l.b16 %v831
    %v872 = vunpack.c.l.b16 %v832
    %v873 = vunpack.c.l.b16 %v833
    %v874 = vunpack.c.l.b16 %v834
    %v875 = vunpack.c.l.b16 %v835
    %v876 = vunpack.c.l.b16 %v836
    %v877 = vunpack.c.l.b16 %v837
    %v878 = vunpack.c.l.b16 %v838
    %v879 = vunpack.c.l.b16 %v839
    %v880 = vunpack.c.l.b16 %v840
    %v881 = vunpack.c.l.b16 %v841
    %v882 = vunpack.c.l.b16 %v842
    %v883 = vunpack.c.l.b16 %v843
    %v884 = vpack.c.b16 %v869, %v868
    %v885 = vpack.c.b16 %v871, %v870
    %v886 = vpack.c.b16 %v873, %v872
    %v887 = vpack.c.b16 %v875, %v874
    %v888 = vpack.c.b16 %v877, %v876
    %v889 = vpack.c.b16 %v879, %v878
    %v890 = vpack.c.b16 %v881, %v880
    %v891 = vpack.c.b16 %v883, %v882
    %900 = vmatprep.subr.bf16.mxu0 0
    %901 = vmatpush1.bf16.msra.mxu0 %v891
    %902 = vmatprep.subr.bf16.mxu0 0
    %903 = vmatpush1.bf16.msra.mxu0 %v890
    %904 = vmatprep.subr.bf16.mxu0 0
    %905 = vmatpush1.bf16.msra.mxu0 %v889
    %906 = vmatprep.subr.bf16.mxu0 0
    %907 = vmatpush1.bf16.msra.mxu0 %v888
    %908 = vmatprep.subr.bf16.mxu0 0
    %909 = vmatpush1.bf16.msra.mxu0 %v887
    %910 = vmatprep.subr.bf16.mxu0 0
    %911 = vmatpush1.bf16.msra.mxu0 %v886
    %912 = vmatprep.subr.bf16.mxu0 0
    %913 = vmatpush1.bf16.msra.mxu0 %v885
    %914 = vmatprep.subr.bf16.mxu0 0
    %915 = vmatpush1.bf16.msra.mxu0 %v884
    %916 = vmatprep.subr.bf16.mxu0 0
    %917 = vmatpush2.bf16.msra.mxu0 0
    %918 = vmatprep.subr.bf16.mxu0 0
    %919 = vmatpush2.bf16.msra.mxu0 0
    %920 = vmatprep.subr.bf16.mxu0 0
    %921 = vmatpush2.bf16.msra.mxu0 0
    %922 = vmatprep.subr.bf16.mxu0 0
    %923 = vmatpush2.bf16.msra.mxu0 0
    %924 = vmatprep.subr.bf16.mxu0 0
    %925 = vmatpush2.bf16.msra.mxu0 0
    %926 = vmatprep.subr.bf16.mxu0 0
    %927 = vmatpush2.bf16.msra.mxu0 0
    %928 = vmatprep.subr.bf16.mxu0 0
    %929 = vmatpush2.bf16.msra.mxu0 0
    %930 = vmatprep.subr.bf16.mxu0 0
    %931 = vmatpush2.bf16.msra.mxu0 0
    %932 = vmatprep.mubr.bf16.mxu0 0
    %933 = vmatmul.mubr.bf16.gmra.mxu0 %v826
    %v934 = vpop.f32.mrf.mxu0
    %v935 = vadd.f32 %v850, %v934
    %v936 = vpop.f32.mrf.mxu0
    %v937 = vpop.f32.mrf.mxu0
    %v938 = vpop.f32.mrf.mxu0
    %939 = vdwg.mxu0
    %s940 = scalar_lea.vmem %s13, 1
    %v941 = vld [vmem:[%s940] sm:$0x1]
    %s942 = scalar_lea.vmem %s14, 1
    %v943 = vld [vmem:[%s942] sm:$0x1]
    %v944 = vmax.f32 %v935, 0.0
    %945 = vadd.xlane.f32.xlu0 %v944
    %v946 = vpop.xlane.xlu0 %945
    %v947 = vmul.f32 %v946, 0.03125
    %v948 = vsub.f32 %v944, %v947
    %v949 = vmul.f32 %v948, %v102
    %v950 = vmul.f32 %v949, %v949
    %951 = vadd.xlane.f32.xlu0 %v950
    %v952 = vpop.xlane.xlu0 %951
    %v953 = vmul.f32 %v952, 0.03125
    %v954 = vadd.f32 %v953, 1e-05
    %v955 = vrsqrt.pop %v954
    %v956 = vmul.f32 %v949, %v955
    %v958 = vlaneseq
    %v959 = vshrl.u32 %v958, 7
    %v960 = vsub.s32 0, %v959
    %v961 = vrot.slane %v941, %v960
    %v963 = vmul.f32 %v956, %v961
    %v965 = vlaneseq
    %v966 = vshrl.u32 %v965, 7
    %v967 = vsub.s32 0, %v966
    %v968 = vrot.slane %v943, %v967
    %v970 = vadd.f32 %v963, %v968
    %s971 = scalar_lea.vmem %s15, 1
    %v972 = vld [vmem:[%s971] sm:$0x1]
    %v974 = vlaneseq
    %v975 = vshrl.u32 %v974, 7
    %v976 = vsub.s32 0, %v975
    %v977 = vrot.slane %v972, %v976
    %v979 = vmul.f32 %v970, %v977
    %980 = vadd.xlane.f32.xlu0 %v979
    %v981 = vpop.xlane.xlu0 %980
    %s982 = scalar_lea.vmem %s16, 1
    %v983 = vld [vmem:[%s982] sm:$0x1]
    %v985 = vlaneseq
    %v986 = vshrl.u32 %v985, 7
    %v987 = vsub.s32 0, %v986
    %v988 = vrot.slane %v983, %v987
    %v990 = vadd.f32 %v981, %v988
    %992 = vrot.lane.b32.xlu0 %v990, 1
    %v993 = vpop.permute.xlu0 %992
    %vm995 = vcmask 15368
    %996 = vst.msk [vmem:[%s17] sm:$0xff] %vm995, %v993
    // Predicated region
    $region82: #{critic_forward.1} parent=1 // pred_check
      _
    $region83: #{critic_forward.1} parent=1 // pred_check_branch
      %998 = sbr.rel (0) target = $region85
    $region84: #{critic_forward.1} parent=1 // pred_region
      _
    $region85: #{critic_forward.1} parent=1 // pred_fallthru
      _
    // Predicated region
    $region86: #{critic_forward.1} parent=1 // pred_check
      _
    $region87: #{critic_forward.1} parent=1 // pred_check_branch
      %1000 = sbr.rel (0) target = $region89
    $region88: #{critic_forward.1} parent=1 // pred_region
      _
    $region89: #{critic_forward.1} parent=1 // pred_fallthru
      _
    %1001 = vsyncpa [#allocation3], 1
    %1002 = vsyncpa [#allocation5], 1

</llo_original>
